<compile_context>
chip_gen: v5e
topology: v5e:2x2
jax: 0.10.0
libtpu: 0.0.40
codegen_flags: <defaults>
</compile_context>

<pallas_src>
import functools
import math

import jax
import jax.numpy as jnp
from jax.experimental import pallas as pl
from jax.experimental.pallas import tpu as pltpu


def _round_up(n, m):
    return ((n + m - 1) // m) * m


# --------------------------------------------------------------------------
# Fully fused kernel: encoders -> concat -> post-norm TransformerEncoderLayer
# --------------------------------------------------------------------------
def _fused_transformer_fusion_kernel(*refs, n_modal, nhead, seq_len, eps=1e-5):
    out_ref = refs[-1]
    enc_refs = refs[: 5 * n_modal]
    (wq_ref, wk_ref, wv_ref, bq_ref, bk_ref, bv_ref,
     wo_ref, bo_ref, g1_ref, be1_ref,
     wf1_ref, bf1_ref, wf2_ref, bf2_ref, g2_ref, be2_ref) = refs[5 * n_modal:-1]

    # ---- modality encoders (dropout = identity in eval mode) ----
    feats = []
    for i in range(n_modal):
        x_ref, w1_ref, b1_ref, w2_ref, b2_ref = enc_refs[5 * i: 5 * i + 5]
        x = x_ref[...].astype(jnp.float32)
        h = jnp.dot(x, w1_ref[...], preferred_element_type=jnp.float32) + b1_ref[...]
        h = jnp.maximum(h, 0.0)                    # hidden_state (not written out)
        f = jnp.dot(h, w2_ref[...], preferred_element_type=jnp.float32) + b2_ref[...]
        feats.append(jnp.maximum(f, 0.0))
    xf = feats[0] if n_modal == 1 else jnp.concatenate(feats, axis=-1)   # (S_pad, D)

    s_pad, d = xf.shape
    dh = d // nhead
    scale = 1.0 / math.sqrt(dh)

    # ---- multi-head self-attention: folded-head full-width Q/K/V projections ----
    q = jnp.dot(xf, wq_ref[...], preferred_element_type=jnp.float32) + bq_ref[...]
    k = jnp.dot(xf, wk_ref[...], preferred_element_type=jnp.float32) + bk_ref[...]
    v = jnp.dot(xf, wv_ref[...], preferred_element_type=jnp.float32) + bv_ref[...]

    if s_pad > seq_len:   # mask padded key rows (only if batch was padded)
        key_idx = jax.lax.broadcasted_iota(jnp.int32, (1, s_pad), 1)
        key_bias = jnp.where(key_idx < seq_len, 0.0, -1e30).astype(jnp.float32)
    else:
        key_bias = None

    head_outs = []
    for hh in range(nhead):
        lo = hh * dh
        qh = q[:, lo:lo + dh]
        kh = k[:, lo:lo + dh]
        vh = v[:, lo:lo + dh]
        s = jax.lax.dot_general(qh * scale, kh, (((1,), (1,)), ((), ())),
                                preferred_element_type=jnp.float32)      # (S_pad, S_pad)
        if key_bias is not None:
            s = s + key_bias
        s = s - jnp.max(s, axis=-1, keepdims=True)
        p = jnp.exp(s)
        # denominator >= 1 (max-subtracted), so approx reciprocal is safe
        p = p * pl.reciprocal(jnp.sum(p, axis=-1, keepdims=True), approx=True)
        head_outs.append(jnp.dot(p, vh, preferred_element_type=jnp.float32))
    ah = head_outs[0] if nhead == 1 else jnp.concatenate(head_outs, axis=-1)
    attn = jnp.dot(ah, wo_ref[...], preferred_element_type=jnp.float32) + bo_ref[...]

    # ---- residual + LayerNorm 1 (post-norm) ----
    x1 = xf + attn
    mu = jnp.mean(x1, axis=-1, keepdims=True)
    var = jnp.mean((x1 - mu) ** 2, axis=-1, keepdims=True)
    x1 = (x1 - mu) * jax.lax.rsqrt(var + eps) * g1_ref[...] + be1_ref[...]

    # ---- FFN (relu) ----
    h1 = jnp.dot(x1, wf1_ref[...], preferred_element_type=jnp.float32) + bf1_ref[...]
    h1 = jnp.maximum(h1, 0.0)
    y = jnp.dot(h1, wf2_ref[...], preferred_element_type=jnp.float32) + bf2_ref[...]

    # ---- residual + LayerNorm 2 ----
    x2 = x1 + y
    mu2 = jnp.mean(x2, axis=-1, keepdims=True)
    var2 = jnp.mean((x2 - mu2) ** 2, axis=-1, keepdims=True)
    x2 = (x2 - mu2) * jax.lax.rsqrt(var2 + eps) * g2_ref[...] + be2_ref[...]

    out_ref[...] = x2.astype(out_ref.dtype)
    # TODO(synk): dropout is omitted (eval/inference semantics); training-mode dropout
    # would draw masks via pltpu.prng_seed + pltpu.prng_random_bits.


# --------------------------------------------------------------------------
# Wrapper: single pallas_call for the whole TransformerFusion forward
# --------------------------------------------------------------------------
def transformer_fusion_forward(x_list, encoder_params, attn_params, *, nhead):
    assert len(x_list) == len(encoder_params)
    n_modal = len(x_list)
    B = x_list[0].shape[0]
    d_enc = encoder_params[0]["w2"].shape[1]
    D = d_enc * n_modal
    Dff = attn_params["wf1"].shape[1]
    Dh = D // nhead

    B_pad = _round_up(max(B, 8), 8)
    x_pads = [x if B_pad == B else jnp.pad(x, ((0, B_pad - B), (0, 0))) for x in x_list]

    args = []
    for x_p, p in zip(x_pads, encoder_params):
        args += [x_p, p["w1"], p["b1"], p["w2"], p["b2"]]
    attn_order = ("wq", "wk", "wv", "bq", "bk", "bv", "wo", "bo", "g1", "be1",
                  "wf1", "bf1", "wf2", "bf2", "g2", "be2")
    args += [attn_params[k] for k in attn_order]

    # advisory cost estimate
    flops = 0
    for x_p in x_pads:
        flops += 2 * B_pad * x_p.shape[1] * d_enc + 2 * B_pad * d_enc * d_enc
    flops += 4 * 2 * B_pad * D * D               # q / k / v / output projections
    flops += nhead * 4 * B_pad * B_pad * Dh      # scores + P@V
    flops += 4 * B_pad * D * Dff                 # FFN
    transc = nhead * B_pad * B_pad + 2 * B_pad
    bytes_accessed = 4 * (sum(int(a.size) for a in args) + B_pad * D)

    kernel = functools.partial(_fused_transformer_fusion_kernel,
                               n_modal=n_modal, nhead=nhead, seq_len=B)

    out = pl.pallas_call(
        kernel,
        out_shape=jax.ShapeDtypeStruct((B_pad, D), x_list[0].dtype),
        compiler_params=pltpu.CompilerParams(
            vmem_limit_bytes=32 * 1024 * 1024,
        ),
        cost_estimate=pl.CostEstimate(
            flops=int(flops), transcendentals=int(transc),
            bytes_accessed=int(bytes_accessed)),
    )(*args)

    return out if B_pad == B else out[:B]


# --------------------------------------------------------------------------
# Parameter init (deterministic, PyTorch-Linear-style uniform bounds).
# Attention weights are lane-dense 2-D [D, D] / [D, Dff] (no per-head 3-D layout).
# --------------------------------------------------------------------------
def init_encoder_params(key, din, dout, dtype=jnp.float32):
    k1, k2, k3, k4 = jax.random.split(key, 4)
    b1 = 1.0 / math.sqrt(din)
    b2 = 1.0 / math.sqrt(dout)
    return {
        "w1": jax.random.uniform(k1, (din, dout), dtype, -b1, b1),   # stored [in, out]
        "b1": jax.random.uniform(k2, (1, dout), dtype, -b1, b1),
        "w2": jax.random.uniform(k3, (dout, dout), dtype, -b2, b2),
        "b2": jax.random.uniform(k4, (1, dout), dtype, -b2, b2),
    }


def init_attention_params(key, d_model, dim_feedforward, dtype=jnp.float32):
    ks = jax.random.split(key, 12)
    bd = 1.0 / math.sqrt(d_model)
    bdf = 1.0 / math.sqrt(dim_feedforward)
    u = lambda k, shape, b: jax.random.uniform(k, shape, dtype, -b, b)
    return {
        "wq": u(ks[0], (d_model, d_model), bd),
        "wk": u(ks[1], (d_model, d_model), bd),
        "wv": u(ks[2], (d_model, d_model), bd),
        "bq": u(ks[3], (1, d_model), bd),
        "bk": u(ks[4], (1, d_model), bd),
        "bv": u(ks[5], (1, d_model), bd),
        "wo": u(ks[6], (d_model, d_model), bd),
        "bo": u(ks[7], (1, d_model), bd),
        "g1": jnp.ones((1, d_model), dtype),
        "be1": jnp.zeros((1, d_model), dtype),
        "wf1": u(ks[8], (d_model, dim_feedforward), bd),
        "bf1": u(ks[9], (1, dim_feedforward), bd),
        "wf2": u(ks[10], (dim_feedforward, d_model), bdf),
        "bf2": u(ks[11], (1, d_model), bdf),
        "g2": jnp.ones((1, d_model), dtype),
        "be2": jnp.zeros((1, d_model), dtype),
    }


# --------------------------------------------------------------------------
# Pure-JAX reference (same math, no Pallas) for correctness checking
# --------------------------------------------------------------------------
def _ref_encoder(x, p):
    h = jnp.maximum(x @ p["w1"] + p["b1"], 0.0)
    return jnp.maximum(h @ p["w2"] + p["b2"], 0.0), h


def _ref_layernorm(x, g, b, eps=1e-5):
    mu = jnp.mean(x, -1, keepdims=True)
    var = jnp.mean((x - mu) ** 2, -1, keepdims=True)
    return (x - mu) * jax.lax.rsqrt(var + eps) * g + b


def _ref_transformer_layer(x, p, nhead, eps=1e-5):
    d = x.shape[-1]
    dh = d // nhead
    scale = 1.0 / math.sqrt(dh)
    q = x @ p["wq"] + p["bq"]
    k = x @ p["wk"] + p["bk"]
    v = x @ p["wv"] + p["bv"]
    outs = []
    for h in range(nhead):
        sl = slice(h * dh, (h + 1) * dh)
        s = (q[:, sl] * scale) @ k[:, sl].T
        a = jax.nn.softmax(s, axis=-1)
        outs.append(a @ v[:, sl])
    attn = jnp.concatenate(outs, axis=-1) @ p["wo"] + p["bo"]
    x1 = _ref_layernorm(x + attn, p["g1"], p["be1"], eps)
    ff = jnp.maximum(x1 @ p["wf1"] + p["bf1"], 0.0) @ p["wf2"] + p["bf2"]
    return _ref_layernorm(x1 + ff, p["g2"], p["be2"], eps)


def _ref_transformer_fusion(x_list, enc_params, attn_params, nhead):
    feats = [_ref_encoder(x, p)[0] for x, p in zip(x_list, enc_params)]
    return _ref_transformer_layer(jnp.concatenate(feats, axis=1), attn_params, nhead)


# --------------------------------------------------------------------------
if __name__ == "__main__":
    B = 8
    in_modal_list = [16, 24]          # two modalities
    out_features = 32
    nhead = 4
    dim_feedforward = 2048            # PyTorch TransformerEncoderLayer default
    d_enc = out_features // len(in_modal_list)

    key = jax.random.PRNGKey(0)
    kx, kenc, kattn = jax.random.split(key, 3)

    x_keys = jax.random.split(kx, len(in_modal_list))
    x_list = [jax.random.normal(k, (B, din), jnp.float32)
              for k, din in zip(x_keys, in_modal_list)]

    enc_keys = jax.random.split(kenc, len(in_modal_list))
    enc_params = [init_encoder_params(k, din, d_enc)
                  for k, din in zip(enc_keys, in_modal_list)]
    attn_params = init_attention_params(kattn, out_features, dim_feedforward)

    out = transformer_fusion_forward(x_list, enc_params, attn_params, nhead=nhead)
    jax.block_until_ready(out)

    ref = _ref_transformer_fusion(x_list, enc_params, attn_params, nhead)
    assert out.shape == (B, out_features), f"bad shape {out.shape}"
    # tolerance slightly relaxed: softmax uses the EUP approximate reciprocal
    assert jnp.allclose(out, ref, atol=5e-3, rtol=5e-3), "output mismatch vs reference"

    print("KERNEL_OK")
</pallas_src>

<mosaic_0001>
module attributes {stable_mosaic.version = 11 : i64} {
  func.func @_fused_transformer_fusion_kernel(%arg0: memref<8x16xf32, #tpu.memory_space<vmem>>, %arg1: memref<16x16xf32, #tpu.memory_space<vmem>>, %arg2: memref<1x16xf32, #tpu.memory_space<vmem>>, %arg3: memref<16x16xf32, #tpu.memory_space<vmem>>, %arg4: memref<1x16xf32, #tpu.memory_space<vmem>>, %arg5: memref<8x24xf32, #tpu.memory_space<vmem>>, %arg6: memref<24x16xf32, #tpu.memory_space<vmem>>, %arg7: memref<1x16xf32, #tpu.memory_space<vmem>>, %arg8: memref<16x16xf32, #tpu.memory_space<vmem>>, %arg9: memref<1x16xf32, #tpu.memory_space<vmem>>, %arg10: memref<32x32xf32, #tpu.memory_space<vmem>>, %arg11: memref<32x32xf32, #tpu.memory_space<vmem>>, %arg12: memref<32x32xf32, #tpu.memory_space<vmem>>, %arg13: memref<1x32xf32, #tpu.memory_space<vmem>>, %arg14: memref<1x32xf32, #tpu.memory_space<vmem>>, %arg15: memref<1x32xf32, #tpu.memory_space<vmem>>, %arg16: memref<32x32xf32, #tpu.memory_space<vmem>>, %arg17: memref<1x32xf32, #tpu.memory_space<vmem>>, %arg18: memref<1x32xf32, #tpu.memory_space<vmem>>, %arg19: memref<1x32xf32, #tpu.memory_space<vmem>>, %arg20: memref<32x2048xf32, #tpu.memory_space<vmem>>, %arg21: memref<1x2048xf32, #tpu.memory_space<vmem>>, %arg22: memref<2048x32xf32, #tpu.memory_space<vmem>>, %arg23: memref<1x32xf32, #tpu.memory_space<vmem>>, %arg24: memref<1x32xf32, #tpu.memory_space<vmem>>, %arg25: memref<1x32xf32, #tpu.memory_space<vmem>>, %arg26: memref<8x32xf32, #tpu.memory_space<vmem>>) attributes {dimension_semantics = [], scalar_prefetch = 0 : i64, scratch_operands = 0 : i64, tpu.core_type = #tpu.core_type<tc>} {
    %c0 = arith.constant 0 : index
    %c0_0 = arith.constant 0 : index
    %0 = vector.load %arg0[%c0, %c0_0] : memref<8x16xf32, #tpu.memory_space<vmem>>, vector<8x16xf32>
    %c0_1 = arith.constant 0 : index
    %c0_2 = arith.constant 0 : index
    %1 = vector.load %arg1[%c0_1, %c0_2] : memref<16x16xf32, #tpu.memory_space<vmem>>, vector<16x16xf32>
    %cst = arith.constant dense<0.000000e+00> : vector<8x16xf32>
    %2 = tpu.matmul %0, %1, %cst {dimension_numbers = #tpu.dot_dimension_numbers<[1], [0], [0], [1], [0, 0, 1, 1], [], []>} : vector<8x16xf32>, vector<16x16xf32>, vector<8x16xf32> -> vector<8x16xf32>
    %c0_3 = arith.constant 0 : index
    %c0_4 = arith.constant 0 : index
    %3 = vector.load %arg2[%c0_3, %c0_4] : memref<1x16xf32, #tpu.memory_space<vmem>>, vector<1x16xf32>
    %4 = vector.broadcast %3 : vector<1x16xf32> to vector<8x16xf32>
    %5 = arith.addf %2, %4 : vector<8x16xf32>
    %cst_5 = arith.constant 0.000000e+00 : f32
    %6 = vector.broadcast %cst_5 : f32 to vector<8x16xf32>
    %7 = arith.maximumf %5, %6 : vector<8x16xf32>
    %c0_6 = arith.constant 0 : index
    %c0_7 = arith.constant 0 : index
    %8 = vector.load %arg3[%c0_6, %c0_7] : memref<16x16xf32, #tpu.memory_space<vmem>>, vector<16x16xf32>
    %cst_8 = arith.constant dense<0.000000e+00> : vector<8x16xf32>
    %9 = tpu.matmul %7, %8, %cst_8 {dimension_numbers = #tpu.dot_dimension_numbers<[1], [0], [0], [1], [0, 0, 1, 1], [], []>} : vector<8x16xf32>, vector<16x16xf32>, vector<8x16xf32> -> vector<8x16xf32>
    %c0_9 = arith.constant 0 : index
    %c0_10 = arith.constant 0 : index
    %10 = vector.load %arg4[%c0_9, %c0_10] : memref<1x16xf32, #tpu.memory_space<vmem>>, vector<1x16xf32>
    %11 = vector.broadcast %10 : vector<1x16xf32> to vector<8x16xf32>
    %12 = arith.addf %9, %11 : vector<8x16xf32>
    %cst_11 = arith.constant 0.000000e+00 : f32
    %13 = vector.broadcast %cst_11 : f32 to vector<8x16xf32>
    %14 = arith.maximumf %12, %13 : vector<8x16xf32>
    %c0_12 = arith.constant 0 : index
    %c0_13 = arith.constant 0 : index
    %15 = vector.load %arg5[%c0_12, %c0_13] : memref<8x24xf32, #tpu.memory_space<vmem>>, vector<8x24xf32>
    %c0_14 = arith.constant 0 : index
    %c0_15 = arith.constant 0 : index
    %16 = vector.load %arg6[%c0_14, %c0_15] : memref<24x16xf32, #tpu.memory_space<vmem>>, vector<24x16xf32>
    %cst_16 = arith.constant dense<0.000000e+00> : vector<8x16xf32>
    %17 = tpu.matmul %15, %16, %cst_16 {dimension_numbers = #tpu.dot_dimension_numbers<[1], [0], [0], [1], [0, 0, 1, 1], [], []>} : vector<8x24xf32>, vector<24x16xf32>, vector<8x16xf32> -> vector<8x16xf32>
    %c0_17 = arith.constant 0 : index
    %c0_18 = arith.constant 0 : index
    %18 = vector.load %arg7[%c0_17, %c0_18] : memref<1x16xf32, #tpu.memory_space<vmem>>, vector<1x16xf32>
    %19 = vector.broadcast %18 : vector<1x16xf32> to vector<8x16xf32>
    %20 = arith.addf %17, %19 : vector<8x16xf32>
    %cst_19 = arith.constant 0.000000e+00 : f32
    %21 = vector.broadcast %cst_19 : f32 to vector<8x16xf32>
    %22 = arith.maximumf %20, %21 : vector<8x16xf32>
    %c0_20 = arith.constant 0 : index
    %c0_21 = arith.constant 0 : index
    %23 = vector.load %arg8[%c0_20, %c0_21] : memref<16x16xf32, #tpu.memory_space<vmem>>, vector<16x16xf32>
    %cst_22 = arith.constant dense<0.000000e+00> : vector<8x16xf32>
    %24 = tpu.matmul %22, %23, %cst_22 {dimension_numbers = #tpu.dot_dimension_numbers<[1], [0], [0], [1], [0, 0, 1, 1], [], []>} : vector<8x16xf32>, vector<16x16xf32>, vector<8x16xf32> -> vector<8x16xf32>
    %c0_23 = arith.constant 0 : index
    %c0_24 = arith.constant 0 : index
    %25 = vector.load %arg9[%c0_23, %c0_24] : memref<1x16xf32, #tpu.memory_space<vmem>>, vector<1x16xf32>
    %26 = vector.broadcast %25 : vector<1x16xf32> to vector<8x16xf32>
    %27 = arith.addf %24, %26 : vector<8x16xf32>
    %cst_25 = arith.constant 0.000000e+00 : f32
    %28 = vector.broadcast %cst_25 : f32 to vector<8x16xf32>
    %29 = arith.maximumf %27, %28 : vector<8x16xf32>
    %30 = tpu.concatenate %14, %29 in 1 : vector<8x16xf32>, vector<8x16xf32> -> vector<8x32xf32>
    %c0_26 = arith.constant 0 : index
    %c0_27 = arith.constant 0 : index
    %31 = vector.load %arg10[%c0_26, %c0_27] : memref<32x32xf32, #tpu.memory_space<vmem>>, vector<32x32xf32>
    %cst_28 = arith.constant dense<0.000000e+00> : vector<8x32xf32>
    %32 = tpu.matmul %30, %31, %cst_28 {dimension_numbers = #tpu.dot_dimension_numbers<[1], [0], [0], [1], [0, 0, 1, 1], [], []>} : vector<8x32xf32>, vector<32x32xf32>, vector<8x32xf32> -> vector<8x32xf32>
    %c0_29 = arith.constant 0 : index
    %c0_30 = arith.constant 0 : index
    %33 = vector.load %arg13[%c0_29, %c0_30] : memref<1x32xf32, #tpu.memory_space<vmem>>, vector<1x32xf32>
    %34 = vector.broadcast %33 : vector<1x32xf32> to vector<8x32xf32>
    %35 = arith.addf %32, %34 : vector<8x32xf32>
    %c0_31 = arith.constant 0 : index
    %c0_32 = arith.constant 0 : index
    %36 = vector.load %arg11[%c0_31, %c0_32] : memref<32x32xf32, #tpu.memory_space<vmem>>, vector<32x32xf32>
    %cst_33 = arith.constant dense<0.000000e+00> : vector<8x32xf32>
    %37 = tpu.matmul %30, %36, %cst_33 {dimension_numbers = #tpu.dot_dimension_numbers<[1], [0], [0], [1], [0, 0, 1, 1], [], []>} : vector<8x32xf32>, vector<32x32xf32>, vector<8x32xf32> -> vector<8x32xf32>
    %c0_34 = arith.constant 0 : index
    %c0_35 = arith.constant 0 : index
    %38 = vector.load %arg14[%c0_34, %c0_35] : memref<1x32xf32, #tpu.memory_space<vmem>>, vector<1x32xf32>
    %39 = vector.broadcast %38 : vector<1x32xf32> to vector<8x32xf32>
    %40 = arith.addf %37, %39 : vector<8x32xf32>
    %c0_36 = arith.constant 0 : index
    %c0_37 = arith.constant 0 : index
    %41 = vector.load %arg12[%c0_36, %c0_37] : memref<32x32xf32, #tpu.memory_space<vmem>>, vector<32x32xf32>
    %cst_38 = arith.constant dense<0.000000e+00> : vector<8x32xf32>
    %42 = tpu.matmul %30, %41, %cst_38 {dimension_numbers = #tpu.dot_dimension_numbers<[1], [0], [0], [1], [0, 0, 1, 1], [], []>} : vector<8x32xf32>, vector<32x32xf32>, vector<8x32xf32> -> vector<8x32xf32>
    %c0_39 = arith.constant 0 : index
    %c0_40 = arith.constant 0 : index
    %43 = vector.load %arg15[%c0_39, %c0_40] : memref<1x32xf32, #tpu.memory_space<vmem>>, vector<1x32xf32>
    %44 = vector.broadcast %43 : vector<1x32xf32> to vector<8x32xf32>
    %45 = arith.addf %42, %44 : vector<8x32xf32>
    %46 = vector.extract_strided_slice %35 {offsets = [0, 0], sizes = [8, 8], strides = [1, 1]} : vector<8x32xf32> to vector<8x8xf32>
    %47 = vector.extract_strided_slice %40 {offsets = [0, 0], sizes = [8, 8], strides = [1, 1]} : vector<8x32xf32> to vector<8x8xf32>
    %48 = vector.extract_strided_slice %45 {offsets = [0, 0], sizes = [8, 8], strides = [1, 1]} : vector<8x32xf32> to vector<8x8xf32>
    %cst_41 = arith.constant 0.353553385 : f32
    %49 = vector.broadcast %cst_41 : f32 to vector<8x8xf32>
    %50 = arith.mulf %46, %49 : vector<8x8xf32>
    %cst_42 = arith.constant dense<0.000000e+00> : vector<8x8xf32>
    %51 = tpu.matmul %50, %47, %cst_42 {dimension_numbers = #tpu.dot_dimension_numbers<[1], [1], [0], [0], [0, 0, 1, 0], [], []>} : vector<8x8xf32>, vector<8x8xf32>, vector<8x8xf32> -> vector<8x8xf32>
    %cst_43 = arith.constant dense<0xFF800000> : vector<8xf32>
    %52 = vector.multi_reduction <maximumf>, %51, %cst_43 [1] : vector<8x8xf32> to vector<8xf32>
    %53 = vector.shape_cast %52 : vector<8xf32> to vector<8x1xf32>
    %54 = vector.broadcast %53 : vector<8x1xf32> to vector<8x8xf32>
    %55 = arith.subf %51, %54 : vector<8x8xf32>
    %56 = math.exp %55 : vector<8x8xf32>
    %cst_44 = arith.constant dense<0.000000e+00> : vector<8xf32>
    %57 = vector.multi_reduction <add>, %56, %cst_44 [1] : vector<8x8xf32> to vector<8xf32>
    %58 = vector.shape_cast %57 : vector<8xf32> to vector<8x1xf32>
    %59 = tpu.reciprocal %58 {approx = true} : vector<8x1xf32> -> vector<8x1xf32>
    %60 = vector.broadcast %59 : vector<8x1xf32> to vector<8x8xf32>
    %61 = arith.mulf %56, %60 : vector<8x8xf32>
    %cst_45 = arith.constant dense<0.000000e+00> : vector<8x8xf32>
    %62 = tpu.matmul %61, %48, %cst_45 {dimension_numbers = #tpu.dot_dimension_numbers<[1], [0], [0], [1], [0, 0, 1, 1], [], []>} : vector<8x8xf32>, vector<8x8xf32>, vector<8x8xf32> -> vector<8x8xf32>
    %63 = vector.extract_strided_slice %35 {offsets = [0, 8], sizes = [8, 8], strides = [1, 1]} : vector<8x32xf32> to vector<8x8xf32>
    %64 = vector.extract_strided_slice %40 {offsets = [0, 8], sizes = [8, 8], strides = [1, 1]} : vector<8x32xf32> to vector<8x8xf32>
    %65 = vector.extract_strided_slice %45 {offsets = [0, 8], sizes = [8, 8], strides = [1, 1]} : vector<8x32xf32> to vector<8x8xf32>
    %cst_46 = arith.constant 0.353553385 : f32
    %66 = vector.broadcast %cst_46 : f32 to vector<8x8xf32>
    %67 = arith.mulf %63, %66 : vector<8x8xf32>
    %cst_47 = arith.constant dense<0.000000e+00> : vector<8x8xf32>
    %68 = tpu.matmul %67, %64, %cst_47 {dimension_numbers = #tpu.dot_dimension_numbers<[1], [1], [0], [0], [0, 0, 1, 0], [], []>} : vector<8x8xf32>, vector<8x8xf32>, vector<8x8xf32> -> vector<8x8xf32>
    %cst_48 = arith.constant dense<0xFF800000> : vector<8xf32>
    %69 = vector.multi_reduction <maximumf>, %68, %cst_48 [1] : vector<8x8xf32> to vector<8xf32>
    %70 = vector.shape_cast %69 : vector<8xf32> to vector<8x1xf32>
    %71 = vector.broadcast %70 : vector<8x1xf32> to vector<8x8xf32>
    %72 = arith.subf %68, %71 : vector<8x8xf32>
    %73 = math.exp %72 : vector<8x8xf32>
    %cst_49 = arith.constant dense<0.000000e+00> : vector<8xf32>
    %74 = vector.multi_reduction <add>, %73, %cst_49 [1] : vector<8x8xf32> to vector<8xf32>
    %75 = vector.shape_cast %74 : vector<8xf32> to vector<8x1xf32>
    %76 = tpu.reciprocal %75 {approx = true} : vector<8x1xf32> -> vector<8x1xf32>
    %77 = vector.broadcast %76 : vector<8x1xf32> to vector<8x8xf32>
    %78 = arith.mulf %73, %77 : vector<8x8xf32>
    %cst_50 = arith.constant dense<0.000000e+00> : vector<8x8xf32>
    %79 = tpu.matmul %78, %65, %cst_50 {dimension_numbers = #tpu.dot_dimension_numbers<[1], [0], [0], [1], [0, 0, 1, 1], [], []>} : vector<8x8xf32>, vector<8x8xf32>, vector<8x8xf32> -> vector<8x8xf32>
    %80 = vector.extract_strided_slice %35 {offsets = [0, 16], sizes = [8, 8], strides = [1, 1]} : vector<8x32xf32> to vector<8x8xf32>
    %81 = vector.extract_strided_slice %40 {offsets = [0, 16], sizes = [8, 8], strides = [1, 1]} : vector<8x32xf32> to vector<8x8xf32>
    %82 = vector.extract_strided_slice %45 {offsets = [0, 16], sizes = [8, 8], strides = [1, 1]} : vector<8x32xf32> to vector<8x8xf32>
    %cst_51 = arith.constant 0.353553385 : f32
    %83 = vector.broadcast %cst_51 : f32 to vector<8x8xf32>
    %84 = arith.mulf %80, %83 : vector<8x8xf32>
    %cst_52 = arith.constant dense<0.000000e+00> : vector<8x8xf32>
    %85 = tpu.matmul %84, %81, %cst_52 {dimension_numbers = #tpu.dot_dimension_numbers<[1], [1], [0], [0], [0, 0, 1, 0], [], []>} : vector<8x8xf32>, vector<8x8xf32>, vector<8x8xf32> -> vector<8x8xf32>
    %cst_53 = arith.constant dense<0xFF800000> : vector<8xf32>
    %86 = vector.multi_reduction <maximumf>, %85, %cst_53 [1] : vector<8x8xf32> to vector<8xf32>
    %87 = vector.shape_cast %86 : vector<8xf32> to vector<8x1xf32>
    %88 = vector.broadcast %87 : vector<8x1xf32> to vector<8x8xf32>
    %89 = arith.subf %85, %88 : vector<8x8xf32>
    %90 = math.exp %89 : vector<8x8xf32>
    %cst_54 = arith.constant dense<0.000000e+00> : vector<8xf32>
    %91 = vector.multi_reduction <add>, %90, %cst_54 [1] : vector<8x8xf32> to vector<8xf32>
    %92 = vector.shape_cast %91 : vector<8xf32> to vector<8x1xf32>
    %93 = tpu.reciprocal %92 {approx = true} : vector<8x1xf32> -> vector<8x1xf32>
    %94 = vector.broadcast %93 : vector<8x1xf32> to vector<8x8xf32>
    %95 = arith.mulf %90, %94 : vector<8x8xf32>
    %cst_55 = arith.constant dense<0.000000e+00> : vector<8x8xf32>
    %96 = tpu.matmul %95, %82, %cst_55 {dimension_numbers = #tpu.dot_dimension_numbers<[1], [0], [0], [1], [0, 0, 1, 1], [], []>} : vector<8x8xf32>, vector<8x8xf32>, vector<8x8xf32> -> vector<8x8xf32>
    %97 = vector.extract_strided_slice %35 {offsets = [0, 24], sizes = [8, 8], strides = [1, 1]} : vector<8x32xf32> to vector<8x8xf32>
    %98 = vector.extract_strided_slice %40 {offsets = [0, 24], sizes = [8, 8], strides = [1, 1]} : vector<8x32xf32> to vector<8x8xf32>
    %99 = vector.extract_strided_slice %45 {offsets = [0, 24], sizes = [8, 8], strides = [1, 1]} : vector<8x32xf32> to vector<8x8xf32>
    %cst_56 = arith.constant 0.353553385 : f32
    %100 = vector.broadcast %cst_56 : f32 to vector<8x8xf32>
    %101 = arith.mulf %97, %100 : vector<8x8xf32>
    %cst_57 = arith.constant dense<0.000000e+00> : vector<8x8xf32>
    %102 = tpu.matmul %101, %98, %cst_57 {dimension_numbers = #tpu.dot_dimension_numbers<[1], [1], [0], [0], [0, 0, 1, 0], [], []>} : vector<8x8xf32>, vector<8x8xf32>, vector<8x8xf32> -> vector<8x8xf32>
    %cst_58 = arith.constant dense<0xFF800000> : vector<8xf32>
    %103 = vector.multi_reduction <maximumf>, %102, %cst_58 [1] : vector<8x8xf32> to vector<8xf32>
    %104 = vector.shape_cast %103 : vector<8xf32> to vector<8x1xf32>
    %105 = vector.broadcast %104 : vector<8x1xf32> to vector<8x8xf32>
    %106 = arith.subf %102, %105 : vector<8x8xf32>
    %107 = math.exp %106 : vector<8x8xf32>
    %cst_59 = arith.constant dense<0.000000e+00> : vector<8xf32>
    %108 = vector.multi_reduction <add>, %107, %cst_59 [1] : vector<8x8xf32> to vector<8xf32>
    %109 = vector.shape_cast %108 : vector<8xf32> to vector<8x1xf32>
    %110 = tpu.reciprocal %109 {approx = true} : vector<8x1xf32> -> vector<8x1xf32>
    %111 = vector.broadcast %110 : vector<8x1xf32> to vector<8x8xf32>
    %112 = arith.mulf %107, %111 : vector<8x8xf32>
    %cst_60 = arith.constant dense<0.000000e+00> : vector<8x8xf32>
    %113 = tpu.matmul %112, %99, %cst_60 {dimension_numbers = #tpu.dot_dimension_numbers<[1], [0], [0], [1], [0, 0, 1, 1], [], []>} : vector<8x8xf32>, vector<8x8xf32>, vector<8x8xf32> -> vector<8x8xf32>
    %114 = tpu.concatenate %62, %79, %96, %113 in 1 : vector<8x8xf32>, vector<8x8xf32>, vector<8x8xf32>, vector<8x8xf32> -> vector<8x32xf32>
    %c0_61 = arith.constant 0 : index
    %c0_62 = arith.constant 0 : index
    %115 = vector.load %arg16[%c0_61, %c0_62] : memref<32x32xf32, #tpu.memory_space<vmem>>, vector<32x32xf32>
    %cst_63 = arith.constant dense<0.000000e+00> : vector<8x32xf32>
    %116 = tpu.matmul %114, %115, %cst_63 {dimension_numbers = #tpu.dot_dimension_numbers<[1], [0], [0], [1], [0, 0, 1, 1], [], []>} : vector<8x32xf32>, vector<32x32xf32>, vector<8x32xf32> -> vector<8x32xf32>
    %c0_64 = arith.constant 0 : index
    %c0_65 = arith.constant 0 : index
    %117 = vector.load %arg17[%c0_64, %c0_65] : memref<1x32xf32, #tpu.memory_space<vmem>>, vector<1x32xf32>
    %118 = vector.broadcast %117 : vector<1x32xf32> to vector<8x32xf32>
    %119 = arith.addf %116, %118 : vector<8x32xf32>
    %120 = arith.addf %30, %119 : vector<8x32xf32>
    %cst_66 = arith.constant dense<0.000000e+00> : vector<8xf32>
    %121 = vector.multi_reduction <add>, %120, %cst_66 [1] : vector<8x32xf32> to vector<8xf32>
    %122 = vector.shape_cast %121 : vector<8xf32> to vector<8x1xf32>
    %cst_67 = arith.constant 3.200000e+01 : f32
    %123 = vector.broadcast %cst_67 : f32 to vector<8x1xf32>
    %124 = arith.divf %122, %123 : vector<8x1xf32>
    %125 = vector.broadcast %124 : vector<8x1xf32> to vector<8x32xf32>
    %126 = arith.subf %120, %125 : vector<8x32xf32>
    %127 = arith.mulf %126, %126 : vector<8x32xf32>
    %cst_68 = arith.constant dense<0.000000e+00> : vector<8xf32>
    %128 = vector.multi_reduction <add>, %127, %cst_68 [1] : vector<8x32xf32> to vector<8xf32>
    %129 = vector.shape_cast %128 : vector<8xf32> to vector<8x1xf32>
    %cst_69 = arith.constant 3.200000e+01 : f32
    %130 = vector.broadcast %cst_69 : f32 to vector<8x1xf32>
    %131 = arith.divf %129, %130 : vector<8x1xf32>
    %132 = vector.broadcast %124 : vector<8x1xf32> to vector<8x32xf32>
    %133 = arith.subf %120, %132 : vector<8x32xf32>
    %cst_70 = arith.constant 9.99999974E-6 : f32
    %134 = vector.broadcast %cst_70 : f32 to vector<8x1xf32>
    %135 = arith.addf %131, %134 : vector<8x1xf32>
    %136 = math.rsqrt %135 : vector<8x1xf32>
    %137 = vector.broadcast %136 : vector<8x1xf32> to vector<8x32xf32>
    %138 = arith.mulf %133, %137 : vector<8x32xf32>
    %c0_71 = arith.constant 0 : index
    %c0_72 = arith.constant 0 : index
    %139 = vector.load %arg18[%c0_71, %c0_72] : memref<1x32xf32, #tpu.memory_space<vmem>>, vector<1x32xf32>
    %140 = vector.broadcast %139 : vector<1x32xf32> to vector<8x32xf32>
    %141 = arith.mulf %138, %140 : vector<8x32xf32>
    %c0_73 = arith.constant 0 : index
    %c0_74 = arith.constant 0 : index
    %142 = vector.load %arg19[%c0_73, %c0_74] : memref<1x32xf32, #tpu.memory_space<vmem>>, vector<1x32xf32>
    %143 = vector.broadcast %142 : vector<1x32xf32> to vector<8x32xf32>
    %144 = arith.addf %141, %143 : vector<8x32xf32>
    %c0_75 = arith.constant 0 : index
    %c0_76 = arith.constant 0 : index
    %145 = vector.load %arg20[%c0_75, %c0_76] : memref<32x2048xf32, #tpu.memory_space<vmem>>, vector<32x2048xf32>
    %cst_77 = arith.constant dense<0.000000e+00> : vector<8x2048xf32>
    %146 = tpu.matmul %144, %145, %cst_77 {dimension_numbers = #tpu.dot_dimension_numbers<[1], [0], [0], [1], [0, 0, 1, 1], [], []>} : vector<8x32xf32>, vector<32x2048xf32>, vector<8x2048xf32> -> vector<8x2048xf32>
    %c0_78 = arith.constant 0 : index
    %c0_79 = arith.constant 0 : index
    %147 = vector.load %arg21[%c0_78, %c0_79] : memref<1x2048xf32, #tpu.memory_space<vmem>>, vector<1x2048xf32>
    %148 = vector.broadcast %147 : vector<1x2048xf32> to vector<8x2048xf32>
    %149 = arith.addf %146, %148 : vector<8x2048xf32>
    %cst_80 = arith.constant 0.000000e+00 : f32
    %150 = vector.broadcast %cst_80 : f32 to vector<8x2048xf32>
    %151 = arith.maximumf %149, %150 : vector<8x2048xf32>
    %c0_81 = arith.constant 0 : index
    %c0_82 = arith.constant 0 : index
    %152 = vector.load %arg22[%c0_81, %c0_82] : memref<2048x32xf32, #tpu.memory_space<vmem>>, vector<2048x32xf32>
    %cst_83 = arith.constant dense<0.000000e+00> : vector<8x32xf32>
    %153 = tpu.matmul %151, %152, %cst_83 {dimension_numbers = #tpu.dot_dimension_numbers<[1], [0], [0], [1], [0, 0, 1, 1], [], []>} : vector<8x2048xf32>, vector<2048x32xf32>, vector<8x32xf32> -> vector<8x32xf32>
    %c0_84 = arith.constant 0 : index
    %c0_85 = arith.constant 0 : index
    %154 = vector.load %arg23[%c0_84, %c0_85] : memref<1x32xf32, #tpu.memory_space<vmem>>, vector<1x32xf32>
    %155 = vector.broadcast %154 : vector<1x32xf32> to vector<8x32xf32>
    %156 = arith.addf %153, %155 : vector<8x32xf32>
    %157 = arith.addf %144, %156 : vector<8x32xf32>
    %cst_86 = arith.constant dense<0.000000e+00> : vector<8xf32>
    %158 = vector.multi_reduction <add>, %157, %cst_86 [1] : vector<8x32xf32> to vector<8xf32>
    %159 = vector.shape_cast %158 : vector<8xf32> to vector<8x1xf32>
    %cst_87 = arith.constant 3.200000e+01 : f32
    %160 = vector.broadcast %cst_87 : f32 to vector<8x1xf32>
    %161 = arith.divf %159, %160 : vector<8x1xf32>
    %162 = vector.broadcast %161 : vector<8x1xf32> to vector<8x32xf32>
    %163 = arith.subf %157, %162 : vector<8x32xf32>
    %164 = arith.mulf %163, %163 : vector<8x32xf32>
    %cst_88 = arith.constant dense<0.000000e+00> : vector<8xf32>
    %165 = vector.multi_reduction <add>, %164, %cst_88 [1] : vector<8x32xf32> to vector<8xf32>
    %166 = vector.shape_cast %165 : vector<8xf32> to vector<8x1xf32>
    %cst_89 = arith.constant 3.200000e+01 : f32
    %167 = vector.broadcast %cst_89 : f32 to vector<8x1xf32>
    %168 = arith.divf %166, %167 : vector<8x1xf32>
    %169 = vector.broadcast %161 : vector<8x1xf32> to vector<8x32xf32>
    %170 = arith.subf %157, %169 : vector<8x32xf32>
    %cst_90 = arith.constant 9.99999974E-6 : f32
    %171 = vector.broadcast %cst_90 : f32 to vector<8x1xf32>
    %172 = arith.addf %168, %171 : vector<8x1xf32>
    %173 = math.rsqrt %172 : vector<8x1xf32>
    %174 = vector.broadcast %173 : vector<8x1xf32> to vector<8x32xf32>
    %175 = arith.mulf %170, %174 : vector<8x32xf32>
    %c0_91 = arith.constant 0 : index
    %c0_92 = arith.constant 0 : index
    %176 = vector.load %arg24[%c0_91, %c0_92] : memref<1x32xf32, #tpu.memory_space<vmem>>, vector<1x32xf32>
    %177 = vector.broadcast %176 : vector<1x32xf32> to vector<8x32xf32>
    %178 = arith.mulf %175, %177 : vector<8x32xf32>
    %c0_93 = arith.constant 0 : index
    %c0_94 = arith.constant 0 : index
    %179 = vector.load %arg25[%c0_93, %c0_94] : memref<1x32xf32, #tpu.memory_space<vmem>>, vector<1x32xf32>
    %180 = vector.broadcast %179 : vector<1x32xf32> to vector<8x32xf32>
    %181 = arith.addf %178, %180 : vector<8x32xf32>
    %c0_95 = arith.constant 0 : index
    %c0_96 = arith.constant 0 : index
    %182 = vector.load %arg26[%c0_95, %c0_96] : memref<8x32xf32, #tpu.memory_space<vmem>>, vector<8x32xf32>
    tpu.vector_store %arg26[%c0_95, %c0_96], %181 {strides = array<i32>} : memref<8x32xf32, #tpu.memory_space<vmem>>, vector<8x32xf32>,
    return
  }
}

</mosaic_0001>

<llo_original>
// kernel: tpu_custom_call.1
$region0: #{tpu_custom_call.1}
  #allocation0 [shape = 'u32[]', space=smem, size = 0x4, offset = 0x4, fixed_abs, tag = 'smem constant byte address 0x4 - core index']
  #allocation1 [shape = 'u32[72,128]{1,0:T(1,128)}', space=vmem, size = 0x9000, scoped, tag = 'internal scratch']
  %s0 = inlined_call_operand.vmem [shape: f32[8,16], index: 0, kind: input, shape index: {}]
  %s1 = inlined_call_operand.vmem [shape: f32[16,16], index: 1, kind: input, shape index: {}]
  %s2 = inlined_call_operand.vmem [shape: f32[1,16], index: 2, kind: input, shape index: {}]
  %s3 = inlined_call_operand.vmem [shape: f32[16,16], index: 3, kind: input, shape index: {}]
  %s4 = inlined_call_operand.vmem [shape: f32[1,16], index: 4, kind: input, shape index: {}]
  %s5 = inlined_call_operand.vmem [shape: f32[8,24], index: 5, kind: input, shape index: {}]
  %s6 = inlined_call_operand.vmem [shape: f32[24,16], index: 6, kind: input, shape index: {}]
  %s7 = inlined_call_operand.vmem [shape: f32[1,16], index: 7, kind: input, shape index: {}]
  %s8 = inlined_call_operand.vmem [shape: f32[16,16], index: 8, kind: input, shape index: {}]
  %s9 = inlined_call_operand.vmem [shape: f32[1,16], index: 9, kind: input, shape index: {}]
  %s10 = inlined_call_operand.vmem [shape: f32[32,32], index: 10, kind: input, shape index: {}]
  %s11 = inlined_call_operand.vmem [shape: f32[32,32], index: 11, kind: input, shape index: {}]
  %s12 = inlined_call_operand.vmem [shape: f32[32,32], index: 12, kind: input, shape index: {}]
  %s13 = inlined_call_operand.vmem [shape: f32[1,32], index: 13, kind: input, shape index: {}]
  %s14 = inlined_call_operand.vmem [shape: f32[1,32], index: 14, kind: input, shape index: {}]
  %s15 = inlined_call_operand.vmem [shape: f32[1,32], index: 15, kind: input, shape index: {}]
  %s16 = inlined_call_operand.vmem [shape: f32[32,32], index: 16, kind: input, shape index: {}]
  %s17 = inlined_call_operand.vmem [shape: f32[1,32], index: 17, kind: input, shape index: {}]
  %s18 = inlined_call_operand.vmem [shape: f32[1,32], index: 18, kind: input, shape index: {}]
  %s19 = inlined_call_operand.vmem [shape: f32[1,32], index: 19, kind: input, shape index: {}]
  %s20 = inlined_call_operand.vmem [shape: f32[32,2048], index: 20, kind: input, shape index: {}]
  %s21 = inlined_call_operand.vmem [shape: f32[1,2048], index: 21, kind: input, shape index: {}]
  %s22 = inlined_call_operand.vmem [shape: f32[2048,32], index: 22, kind: input, shape index: {}]
  %s23 = inlined_call_operand.vmem [shape: f32[1,32], index: 23, kind: input, shape index: {}]
  %s24 = inlined_call_operand.vmem [shape: f32[1,32], index: 24, kind: input, shape index: {}]
  %s25 = inlined_call_operand.vmem [shape: f32[1,32], index: 25, kind: input, shape index: {}]
  %s26 = inlined_call_operand.hbm [shape: f32[8,32], index: 26, kind: output, shape index: {}]
  %s27 = sld [smem:[#allocation0]]
  $region114: #{tpu_custom_call.1} parent=0
    _
  %s29 = ssub.s32 1, %s27
  %s30 = scalar_select 0, %s29, %s27
  $region1: #{tpu_custom_call.1} parent=0
    #allocation2 [shape = 'u8[4096]{0}', space=vmem, size = 0x1000, scoped, tag = 'output window, operand 0, single buffered']
    #allocation3 [shape = 's32[1]{0}', space=sflag, size = 0x4, scoped, tag = 'scoped memory for tpu_custom_call.1']
    %31 = vsyncpa [#allocation3], 0
    // Predicated region
    $region2: #{tpu_custom_call.1} parent=1 // pred_check
      _
    $region3: #{tpu_custom_call.1} parent=1 // pred_check_branch
      %33 = sbr.rel (0) target = $region5
    $region4: #{tpu_custom_call.1} parent=1 // pred_region
      _
    $region5: #{tpu_custom_call.1} parent=1 // pred_fallthru
      _
    // Predicated region
    $region6: #{tpu_custom_call.1} parent=1 // pred_check
      _
    $region7: #{tpu_custom_call.1} parent=1 // pred_check_branch
      %35 = sbr.rel (0) target = $region9
    $region8: #{tpu_custom_call.1} parent=1 // pred_region
      _
    $region9: #{tpu_custom_call.1} parent=1 // pred_fallthru
      _
    // Predicated region
    $region10: #{tpu_custom_call.1} parent=1 // pred_check
      _
    $region11: #{tpu_custom_call.1} parent=1 // pred_check_branch
      %37 = sbr.rel (0) target = $region13
    $region12: #{tpu_custom_call.1} parent=1 // pred_region
      _
    $region13: #{tpu_custom_call.1} parent=1 // pred_fallthru
      _
    // Predicated region
    $region14: #{tpu_custom_call.1} parent=1 // pred_check
      _
    $region15: #{tpu_custom_call.1} parent=1 // pred_check_branch
      %39 = sbr.rel (0) target = $region17
    $region16: #{tpu_custom_call.1} parent=1 // pred_region
      _
    $region17: #{tpu_custom_call.1} parent=1 // pred_fallthru
      _
    // Predicated region
    $region18: #{tpu_custom_call.1} parent=1 // pred_check
      _
    $region19: #{tpu_custom_call.1} parent=1 // pred_check_branch
      %41 = sbr.rel (0) target = $region21
    $region20: #{tpu_custom_call.1} parent=1 // pred_region
      _
    $region21: #{tpu_custom_call.1} parent=1 // pred_fallthru
      _
    // Predicated region
    $region22: #{tpu_custom_call.1} parent=1 // pred_check
      _
    $region23: #{tpu_custom_call.1} parent=1 // pred_check_branch
      %43 = sbr.rel (0) target = $region25
    $region24: #{tpu_custom_call.1} parent=1 // pred_region
      _
    $region25: #{tpu_custom_call.1} parent=1 // pred_fallthru
      _
    // Predicated region
    $region26: #{tpu_custom_call.1} parent=1 // pred_check
      _
    $region27: #{tpu_custom_call.1} parent=1 // pred_check_branch
      %45 = sbr.rel (0) target = $region29
    $region28: #{tpu_custom_call.1} parent=1 // pred_region
      _
    $region29: #{tpu_custom_call.1} parent=1 // pred_fallthru
      _
    // Predicated region
    $region30: #{tpu_custom_call.1} parent=1 // pred_check
      _
    $region31: #{tpu_custom_call.1} parent=1 // pred_check_branch
      %47 = sbr.rel (0) target = $region33
    $region32: #{tpu_custom_call.1} parent=1 // pred_region
      _
    $region33: #{tpu_custom_call.1} parent=1 // pred_fallthru
      _
    // Predicated region
    $region34: #{tpu_custom_call.1} parent=1 // pred_check
      _
    $region35: #{tpu_custom_call.1} parent=1 // pred_check_branch
      %49 = sbr.rel (0) target = $region37
    $region36: #{tpu_custom_call.1} parent=1 // pred_region
      _
    $region37: #{tpu_custom_call.1} parent=1 // pred_fallthru
      _
    // Predicated region
    $region38: #{tpu_custom_call.1} parent=1 // pred_check
      _
    $region39: #{tpu_custom_call.1} parent=1 // pred_check_branch
      %51 = sbr.rel (0) target = $region41
    $region40: #{tpu_custom_call.1} parent=1 // pred_region
      _
    $region41: #{tpu_custom_call.1} parent=1 // pred_fallthru
      _
    // Predicated region
    $region42: #{tpu_custom_call.1} parent=1 // pred_check
      _
    $region43: #{tpu_custom_call.1} parent=1 // pred_check_branch
      %53 = sbr.rel (0) target = $region45
    $region44: #{tpu_custom_call.1} parent=1 // pred_region
      _
    $region45: #{tpu_custom_call.1} parent=1 // pred_fallthru
      _
    // Predicated region
    $region46: #{tpu_custom_call.1} parent=1 // pred_check
      _
    $region47: #{tpu_custom_call.1} parent=1 // pred_check_branch
      %55 = sbr.rel (0) target = $region49
    $region48: #{tpu_custom_call.1} parent=1 // pred_region
      _
    $region49: #{tpu_custom_call.1} parent=1 // pred_fallthru
      _
    // Predicated region
    $region50: #{tpu_custom_call.1} parent=1 // pred_check
      _
    $region51: #{tpu_custom_call.1} parent=1 // pred_check_branch
      %57 = sbr.rel (0) target = $region53
    $region52: #{tpu_custom_call.1} parent=1 // pred_region
      _
    $region53: #{tpu_custom_call.1} parent=1 // pred_fallthru
      _
    // Predicated region
    $region54: #{tpu_custom_call.1} parent=1 // pred_check
      _
    $region55: #{tpu_custom_call.1} parent=1 // pred_check_branch
      %59 = sbr.rel (0) target = $region57
    $region56: #{tpu_custom_call.1} parent=1 // pred_region
      _
    $region57: #{tpu_custom_call.1} parent=1 // pred_fallthru
      _
    // Predicated region
    $region58: #{tpu_custom_call.1} parent=1 // pred_check
      _
    $region59: #{tpu_custom_call.1} parent=1 // pred_check_branch
      %61 = sbr.rel (0) target = $region61
    $region60: #{tpu_custom_call.1} parent=1 // pred_region
      _
    $region61: #{tpu_custom_call.1} parent=1 // pred_fallthru
      _
    // Predicated region
    $region62: #{tpu_custom_call.1} parent=1 // pred_check
      _
    $region63: #{tpu_custom_call.1} parent=1 // pred_check_branch
      %63 = sbr.rel (0) target = $region65
    $region64: #{tpu_custom_call.1} parent=1 // pred_region
      _
    $region65: #{tpu_custom_call.1} parent=1 // pred_fallthru
      _
    // Predicated region
    $region66: #{tpu_custom_call.1} parent=1 // pred_check
      _
    $region67: #{tpu_custom_call.1} parent=1 // pred_check_branch
      %65 = sbr.rel (0) target = $region69
    $region68: #{tpu_custom_call.1} parent=1 // pred_region
      _
    $region69: #{tpu_custom_call.1} parent=1 // pred_fallthru
      _
    // Predicated region
    $region70: #{tpu_custom_call.1} parent=1 // pred_check
      _
    $region71: #{tpu_custom_call.1} parent=1 // pred_check_branch
      %67 = sbr.rel (0) target = $region73
    $region72: #{tpu_custom_call.1} parent=1 // pred_region
      _
    $region73: #{tpu_custom_call.1} parent=1 // pred_fallthru
      _
    // Predicated region
    $region74: #{tpu_custom_call.1} parent=1 // pred_check
      _
    $region75: #{tpu_custom_call.1} parent=1 // pred_check_branch
      %69 = sbr.rel (0) target = $region77
    $region76: #{tpu_custom_call.1} parent=1 // pred_region
      _
    $region77: #{tpu_custom_call.1} parent=1 // pred_fallthru
      _
    // Predicated region
    $region78: #{tpu_custom_call.1} parent=1 // pred_check
      _
    $region79: #{tpu_custom_call.1} parent=1 // pred_check_branch
      %71 = sbr.rel (0) target = $region81
    $region80: #{tpu_custom_call.1} parent=1 // pred_region
      _
    $region81: #{tpu_custom_call.1} parent=1 // pred_fallthru
      _
    // Predicated region
    $region82: #{tpu_custom_call.1} parent=1 // pred_check
      _
    $region83: #{tpu_custom_call.1} parent=1 // pred_check_branch
      %73 = sbr.rel (0) target = $region85
    $region84: #{tpu_custom_call.1} parent=1 // pred_region
      _
    $region85: #{tpu_custom_call.1} parent=1 // pred_fallthru
      _
    // Predicated region
    $region86: #{tpu_custom_call.1} parent=1 // pred_check
      _
    $region87: #{tpu_custom_call.1} parent=1 // pred_check_branch
      %75 = sbr.rel (0) target = $region89
    $region88: #{tpu_custom_call.1} parent=1 // pred_region
      _
    $region89: #{tpu_custom_call.1} parent=1 // pred_fallthru
      _
    // Predicated region
    $region90: #{tpu_custom_call.1} parent=1 // pred_check
      _
    $region91: #{tpu_custom_call.1} parent=1 // pred_check_branch
      %77 = sbr.rel (0) target = $region93
    $region92: #{tpu_custom_call.1} parent=1 // pred_region
      _
    $region93: #{tpu_custom_call.1} parent=1 // pred_fallthru
      _
    // Predicated region
    $region94: #{tpu_custom_call.1} parent=1 // pred_check
      _
    $region95: #{tpu_custom_call.1} parent=1 // pred_check_branch
      %79 = sbr.rel (0) target = $region97
    $region96: #{tpu_custom_call.1} parent=1 // pred_region
      _
    $region97: #{tpu_custom_call.1} parent=1 // pred_fallthru
      _
    // Predicated region
    $region98: #{tpu_custom_call.1} parent=1 // pred_check
      _
    $region99: #{tpu_custom_call.1} parent=1 // pred_check_branch
      %81 = sbr.rel (0) target = $region101
    $region100: #{tpu_custom_call.1} parent=1 // pred_region
      _
    $region101: #{tpu_custom_call.1} parent=1 // pred_fallthru
      _
    // Predicated region
    $region102: #{tpu_custom_call.1} parent=1 // pred_check
      _
    $region103: #{tpu_custom_call.1} parent=1 // pred_check_branch
      %83 = sbr.rel (0) target = $region105
    $region104: #{tpu_custom_call.1} parent=1 // pred_region
      _
    $region105: #{tpu_custom_call.1} parent=1 // pred_fallthru
      _
    %v84 = vld [vmem:[%s0] sm:$0xff]
    %v85 = vld [vmem:[%s1] sm:$0xff]
    %v86 = vld [vmem:[%s1 + $0x8] sm:$0xff]
    %v87 = vld [vmem:[%s2] sm:$0x1]
    %v89 = vperm.slane %v87, 0
    %vm91 = vcmask 130048
    %v93 = vsel %vm91, %v84, 0
    %95 = vmatpush.msra.mxu0 0.0
    %96 = vmatpush.msra.mxu0 0.0
    %97 = vmatpush.msra.mxu0 0.0
    %98 = vmatpush.msra.mxu0 0.0
    %99 = vmatpush.msra.mxu0 0.0
    %100 = vmatpush.msra.mxu0 0.0
    %101 = vmatpush.msra.mxu0 0.0
    %102 = vmatpush.msra.mxu0 0.0
    %103 = vmatpush.msra.mxu0 0.0
    %104 = vmatpush.msra.mxu0 0.0
    %105 = vmatpush.msra.mxu0 0.0
    %106 = vmatpush.msra.mxu0 0.0
    %107 = vmatpush.msra.mxu0 0.0
    %108 = vmatpush.msra.mxu0 0.0
    %109 = vmatpush.msra.mxu0 %v86
    %110 = vmatpush.msra.mxu0 %v85
    %111 = vmatmul.f32.gmra.mxu0 %v93
    %v112 = vpop.f32.mrf.mxu0
    %v113 = vadd.f32 %v89, %v112
    %114 = vdwg.mxu0
    %v115 = vmax.f32 %v113, 0.0
    %v116 = vld [vmem:[%s3] sm:$0xff]
    %v117 = vld [vmem:[%s3 + $0x8] sm:$0xff]
    %v118 = vld [vmem:[%s4] sm:$0x1]
    %v120 = vperm.slane %v118, 0
    %v123 = vsel %vm91, %v115, 0
    %125 = vmatpush.msra.mxu0 0.0
    %126 = vmatpush.msra.mxu0 0.0
    %127 = vmatpush.msra.mxu0 0.0
    %128 = vmatpush.msra.mxu0 0.0
    %129 = vmatpush.msra.mxu0 0.0
    %130 = vmatpush.msra.mxu0 0.0
    %131 = vmatpush.msra.mxu0 0.0
    %132 = vmatpush.msra.mxu0 0.0
    %133 = vmatpush.msra.mxu0 0.0
    %134 = vmatpush.msra.mxu0 0.0
    %135 = vmatpush.msra.mxu0 0.0
    %136 = vmatpush.msra.mxu0 0.0
    %137 = vmatpush.msra.mxu0 0.0
    %138 = vmatpush.msra.mxu0 0.0
    %139 = vmatpush.msra.mxu0 %v117
    %140 = vmatpush.msra.mxu0 %v116
    %141 = vmatmul.f32.gmra.mxu0 %v123
    %v142 = vpop.f32.mrf.mxu0
    %v143 = vadd.f32 %v120, %v142
    %144 = vdwg.mxu0
    %v145 = vmax.f32 %v143, 0.0
    %v146 = vld [vmem:[%s5] sm:$0xff]
    %v147 = vld [vmem:[%s6] sm:$0xff]
    %v148 = vld [vmem:[%s6 + $0x8] sm:$0xff]
    %v149 = vld [vmem:[%s6 + $0x10] sm:$0xff]
    %v150 = vld [vmem:[%s7] sm:$0x1]
    %v152 = vperm.slane %v150, 0
    %vm154 = vcmask 195584
    %v156 = vsel %vm154, %v146, 0
    %158 = vmatpush.msra.mxu0 0.0
    %159 = vmatpush.msra.mxu0 0.0
    %160 = vmatpush.msra.mxu0 0.0
    %161 = vmatpush.msra.mxu0 0.0
    %162 = vmatpush.msra.mxu0 0.0
    %163 = vmatpush.msra.mxu0 0.0
    %164 = vmatpush.msra.mxu0 0.0
    %165 = vmatpush.msra.mxu0 0.0
    %166 = vmatpush.msra.mxu0 0.0
    %167 = vmatpush.msra.mxu0 0.0
    %168 = vmatpush.msra.mxu0 0.0
    %169 = vmatpush.msra.mxu0 0.0
    %170 = vmatpush.msra.mxu0 0.0
    %171 = vmatpush.msra.mxu0 %v149
    %172 = vmatpush.msra.mxu0 %v148
    %173 = vmatpush.msra.mxu0 %v147
    %174 = vmatmul.f32.gmra.mxu0 %v156
    %v175 = vpop.f32.mrf.mxu0
    %v176 = vadd.f32 %v152, %v175
    %177 = vdwg.mxu0
    %v178 = vmax.f32 %v176, 0.0
    %v179 = vld [vmem:[%s8] sm:$0xff]
    %v180 = vld [vmem:[%s8 + $0x8] sm:$0xff]
    %v181 = vld [vmem:[%s9] sm:$0x1]
    %v183 = vperm.slane %v181, 0
    %v186 = vsel %vm91, %v178, 0
    %188 = vmatpush.msra.mxu0 0.0
    %189 = vmatpush.msra.mxu0 0.0
    %190 = vmatpush.msra.mxu0 0.0
    %191 = vmatpush.msra.mxu0 0.0
    %192 = vmatpush.msra.mxu0 0.0
    %193 = vmatpush.msra.mxu0 0.0
    %194 = vmatpush.msra.mxu0 0.0
    %195 = vmatpush.msra.mxu0 0.0
    %196 = vmatpush.msra.mxu0 0.0
    %197 = vmatpush.msra.mxu0 0.0
    %198 = vmatpush.msra.mxu0 0.0
    %199 = vmatpush.msra.mxu0 0.0
    %200 = vmatpush.msra.mxu0 0.0
    %201 = vmatpush.msra.mxu0 0.0
    %202 = vmatpush.msra.mxu0 %v180
    %203 = vmatpush.msra.mxu0 %v179
    %204 = vmatmul.f32.gmra.mxu0 %v186
    %v205 = vpop.f32.mrf.mxu0
    %v206 = vadd.f32 %v183, %v205
    %207 = vdwg.mxu0
    %v208 = vmax.f32 %v206, 0.0
    %210 = vrot.lane.b32.xlu0 %v208, 16
    %v211 = vpop.permute.xlu0 %210
    %v213 = vsel %vm91, %v145, %v211
    %v214 = vld [vmem:[%s10] sm:$0xff]
    %v215 = vld [vmem:[%s10 + $0x8] sm:$0xff]
    %v216 = vld [vmem:[%s10 + $0x10] sm:$0xff]
    %v217 = vld [vmem:[%s10 + $0x18] sm:$0xff]
    %v218 = vld [vmem:[%s13] sm:$0x1]
    %v220 = vperm.slane %v218, 0
    %vm222 = vcmask 261120
    %v224 = vsel %vm222, %v213, 0
    %226 = vmatpush.msra.mxu0 0.0
    %227 = vmatpush.msra.mxu0 0.0
    %228 = vmatpush.msra.mxu0 0.0
    %229 = vmatpush.msra.mxu0 0.0
    %230 = vmatpush.msra.mxu0 0.0
    %231 = vmatpush.msra.mxu0 0.0
    %232 = vmatpush.msra.mxu0 0.0
    %233 = vmatpush.msra.mxu0 0.0
    %234 = vmatpush.msra.mxu0 0.0
    %235 = vmatpush.msra.mxu0 0.0
    %236 = vmatpush.msra.mxu0 0.0
    %237 = vmatpush.msra.mxu0 0.0
    %238 = vmatpush.msra.mxu0 %v217
    %239 = vmatpush.msra.mxu0 %v216
    %240 = vmatpush.msra.mxu0 %v215
    %241 = vmatpush.msra.mxu0 %v214
    %242 = vmatmul.f32.gmra.mxu0 %v224
    %v243 = vpop.f32.mrf.mxu0
    %v244 = vadd.f32 %v220, %v243
    %245 = vdwg.mxu0
    %v246 = vld [vmem:[%s11] sm:$0xff]
    %v247 = vld [vmem:[%s11 + $0x8] sm:$0xff]
    %v248 = vld [vmem:[%s11 + $0x10] sm:$0xff]
    %v249 = vld [vmem:[%s11 + $0x18] sm:$0xff]
    %v250 = vld [vmem:[%s14] sm:$0x1]
    %v252 = vperm.slane %v250, 0
    %254 = vmatpush.msra.mxu0 0.0
    %255 = vmatpush.msra.mxu0 0.0
    %256 = vmatpush.msra.mxu0 0.0
    %257 = vmatpush.msra.mxu0 0.0
    %258 = vmatpush.msra.mxu0 0.0
    %259 = vmatpush.msra.mxu0 0.0
    %260 = vmatpush.msra.mxu0 0.0
    %261 = vmatpush.msra.mxu0 0.0
    %262 = vmatpush.msra.mxu0 0.0
    %263 = vmatpush.msra.mxu0 0.0
    %264 = vmatpush.msra.mxu0 0.0
    %265 = vmatpush.msra.mxu0 0.0
    %266 = vmatpush.msra.mxu0 %v249
    %267 = vmatpush.msra.mxu0 %v248
    %268 = vmatpush.msra.mxu0 %v247
    %269 = vmatpush.msra.mxu0 %v246
    %270 = vmatmul.f32.gmra.mxu0 %v224
    %v271 = vpop.f32.mrf.mxu0
    %v272 = vadd.f32 %v252, %v271
    %273 = vdwg.mxu0
    %v274 = vld [vmem:[%s12] sm:$0xff]
    %v275 = vld [vmem:[%s12 + $0x8] sm:$0xff]
    %v276 = vld [vmem:[%s12 + $0x10] sm:$0xff]
    %v277 = vld [vmem:[%s12 + $0x18] sm:$0xff]
    %v278 = vld [vmem:[%s15] sm:$0x1]
    %v280 = vperm.slane %v278, 0
    %282 = vmatpush.msra.mxu0 0.0
    %283 = vmatpush.msra.mxu0 0.0
    %284 = vmatpush.msra.mxu0 0.0
    %285 = vmatpush.msra.mxu0 0.0
    %286 = vmatpush.msra.mxu0 0.0
    %287 = vmatpush.msra.mxu0 0.0
    %288 = vmatpush.msra.mxu0 0.0
    %289 = vmatpush.msra.mxu0 0.0
    %290 = vmatpush.msra.mxu0 0.0
    %291 = vmatpush.msra.mxu0 0.0
    %292 = vmatpush.msra.mxu0 0.0
    %293 = vmatpush.msra.mxu0 0.0
    %294 = vmatpush.msra.mxu0 %v277
    %295 = vmatpush.msra.mxu0 %v276
    %296 = vmatpush.msra.mxu0 %v275
    %297 = vmatpush.msra.mxu0 %v274
    %298 = vmatmul.f32.gmra.mxu0 %v224
    %v299 = vpop.f32.mrf.mxu0
    %v300 = vadd.f32 %v280, %v299
    %301 = vdwg.mxu0
    %v302 = vmul.f32 %v244, 0.35355338
    %vm303 = vcmask 64512
    %v305 = vsel %vm303, %v302, 0
    %v308 = vsel %vm303, %v272, 0
    %310 = vmatpush.xpose.msra.mxu0 0.0
    %311 = vmatpush.xpose.msra.mxu0 0.0
    %312 = vmatpush.xpose.msra.mxu0 0.0
    %313 = vmatpush.xpose.msra.mxu0 0.0
    %314 = vmatpush.xpose.msra.mxu0 0.0
    %315 = vmatpush.xpose.msra.mxu0 0.0
    %316 = vmatpush.xpose.msra.mxu0 0.0
    %317 = vmatpush.xpose.msra.mxu0 0.0
    %318 = vmatpush.xpose.msra.mxu0 0.0
    %319 = vmatpush.xpose.msra.mxu0 0.0
    %320 = vmatpush.xpose.msra.mxu0 0.0
    %321 = vmatpush.xpose.msra.mxu0 0.0
    %322 = vmatpush.xpose.msra.mxu0 0.0
    %323 = vmatpush.xpose.msra.mxu0 0.0
    %324 = vmatpush.xpose.msra.mxu0 0.0
    %325 = vmatpush.xpose.msra.mxu0 %v308
    %326 = vmatmul.f32.gmra.mxu0 %v305
    %v327 = vpop.f32.mrf.mxu0
    %v328 = vadd.f32 0.0, %v327
    %329 = vdwg.mxu0
    %v330 = vsel %vm303, %v328, -inf
    %331 = vmax.xlane.f32.xlu0 %v330
    %v332 = vpop.xlane.xlu0 %331
    %v333 = vsub.f32 %v328, %v332
    %v334 = vmul.f32 %v333, 1.442695
    %v335 = vpow.pop %v334
    %v336 = vsel %vm303, %v335, 0.0
    %337 = vadd.xlane.f32.xlu0 %v336
    %v338 = vpop.xlane.xlu0 %337
    %v339 = vrcp.pop %v338
    %v340 = vmul.f32 %v335, %v339
    %v342 = vsel %vm303, %v340, 0
    %344 = vmatpush.msra.mxu0 0.0
    %345 = vmatpush.msra.mxu0 0.0
    %346 = vmatpush.msra.mxu0 0.0
    %347 = vmatpush.msra.mxu0 0.0
    %348 = vmatpush.msra.mxu0 0.0
    %349 = vmatpush.msra.mxu0 0.0
    %350 = vmatpush.msra.mxu0 0.0
    %351 = vmatpush.msra.mxu0 0.0
    %352 = vmatpush.msra.mxu0 0.0
    %353 = vmatpush.msra.mxu0 0.0
    %354 = vmatpush.msra.mxu0 0.0
    %355 = vmatpush.msra.mxu0 0.0
    %356 = vmatpush.msra.mxu0 0.0
    %357 = vmatpush.msra.mxu0 0.0
    %358 = vmatpush.msra.mxu0 0.0
    %359 = vmatpush.msra.mxu0 %v300
    %360 = vmatmul.f32.gmra.mxu0 %v342
    %v361 = vpop.f32.mrf.mxu0
    %v362 = vadd.f32 0.0, %v361
    %363 = vdwg.mxu0
    %364 = vrot.lane.b32.xlu0 %v302, 120
    %v365 = vpop.permute.xlu0 %364
    %366 = vrot.lane.b32.xlu0 %v272, 120
    %v367 = vpop.permute.xlu0 %366
    %v368 = vsel %vm303, %v365, 0
    %v370 = vsel %vm303, %v367, 0
    %372 = vmatpush.xpose.msra.mxu0 0.0
    %373 = vmatpush.xpose.msra.mxu0 0.0
    %374 = vmatpush.xpose.msra.mxu0 0.0
    %375 = vmatpush.xpose.msra.mxu0 0.0
    %376 = vmatpush.xpose.msra.mxu0 0.0
    %377 = vmatpush.xpose.msra.mxu0 0.0
    %378 = vmatpush.xpose.msra.mxu0 0.0
    %379 = vmatpush.xpose.msra.mxu0 0.0
    %380 = vmatpush.xpose.msra.mxu0 0.0
    %381 = vmatpush.xpose.msra.mxu0 0.0
    %382 = vmatpush.xpose.msra.mxu0 0.0
    %383 = vmatpush.xpose.msra.mxu0 0.0
    %384 = vmatpush.xpose.msra.mxu0 0.0
    %385 = vmatpush.xpose.msra.mxu0 0.0
    %386 = vmatpush.xpose.msra.mxu0 0.0
    %387 = vmatpush.xpose.msra.mxu0 %v370
    %388 = vmatmul.f32.gmra.mxu0 %v368
    %v389 = vpop.f32.mrf.mxu0
    %v390 = vadd.f32 0.0, %v389
    %391 = vdwg.mxu0
    %v392 = vsel %vm303, %v390, -inf
    %393 = vmax.xlane.f32.xlu0 %v392
    %v394 = vpop.xlane.xlu0 %393
    %v395 = vsub.f32 %v390, %v394
    %v396 = vmul.f32 %v395, 1.442695
    %v397 = vpow.pop %v396
    %v398 = vsel %vm303, %v397, 0.0
    %399 = vadd.xlane.f32.xlu0 %v398
    %v400 = vpop.xlane.xlu0 %399
    %v401 = vrcp.pop %v400
    %v402 = vmul.f32 %v397, %v401
    %404 = vrot.lane.b32.xlu0 %v300, 120
    %v405 = vpop.permute.xlu0 %404
    %v408 = vsel %vm303, %v402, 0
    %410 = vmatpush.msra.mxu0 0.0
    %411 = vmatpush.msra.mxu0 0.0
    %412 = vmatpush.msra.mxu0 0.0
    %413 = vmatpush.msra.mxu0 0.0
    %414 = vmatpush.msra.mxu0 0.0
    %415 = vmatpush.msra.mxu0 0.0
    %416 = vmatpush.msra.mxu0 0.0
    %417 = vmatpush.msra.mxu0 0.0
    %418 = vmatpush.msra.mxu0 0.0
    %419 = vmatpush.msra.mxu0 0.0
    %420 = vmatpush.msra.mxu0 0.0
    %421 = vmatpush.msra.mxu0 0.0
    %422 = vmatpush.msra.mxu0 0.0
    %423 = vmatpush.msra.mxu0 0.0
    %424 = vmatpush.msra.mxu0 0.0
    %425 = vmatpush.msra.mxu0 %v405
    %426 = vmatmul.f32.gmra.mxu0 %v408
    %v427 = vpop.f32.mrf.mxu0
    %v428 = vadd.f32 0.0, %v427
    %429 = vdwg.mxu0
    %430 = vrot.lane.b32.xlu0 %v302, 112
    %v431 = vpop.permute.xlu0 %430
    %432 = vrot.lane.b32.xlu0 %v272, 112
    %v433 = vpop.permute.xlu0 %432
    %v434 = vsel %vm303, %v431, 0
    %v436 = vsel %vm303, %v433, 0
    %438 = vmatpush.xpose.msra.mxu0 0.0
    %439 = vmatpush.xpose.msra.mxu0 0.0
    %440 = vmatpush.xpose.msra.mxu0 0.0
    %441 = vmatpush.xpose.msra.mxu0 0.0
    %442 = vmatpush.xpose.msra.mxu0 0.0
    %443 = vmatpush.xpose.msra.mxu0 0.0
    %444 = vmatpush.xpose.msra.mxu0 0.0
    %445 = vmatpush.xpose.msra.mxu0 0.0
    %446 = vmatpush.xpose.msra.mxu0 0.0
    %447 = vmatpush.xpose.msra.mxu0 0.0
    %448 = vmatpush.xpose.msra.mxu0 0.0
    %449 = vmatpush.xpose.msra.mxu0 0.0
    %450 = vmatpush.xpose.msra.mxu0 0.0
    %451 = vmatpush.xpose.msra.mxu0 0.0
    %452 = vmatpush.xpose.msra.mxu0 0.0
    %453 = vmatpush.xpose.msra.mxu0 %v436
    %454 = vmatmul.f32.gmra.mxu0 %v434
    %v455 = vpop.f32.mrf.mxu0
    %v456 = vadd.f32 0.0, %v455
    %457 = vdwg.mxu0
    %v458 = vsel %vm303, %v456, -inf
    %459 = vmax.xlane.f32.xlu0 %v458
    %v460 = vpop.xlane.xlu0 %459
    %v461 = vsub.f32 %v456, %v460
    %v462 = vmul.f32 %v461, 1.442695
    %v463 = vpow.pop %v462
    %v464 = vsel %vm303, %v463, 0.0
    %465 = vadd.xlane.f32.xlu0 %v464
    %v466 = vpop.xlane.xlu0 %465
    %v467 = vrcp.pop %v466
    %v468 = vmul.f32 %v463, %v467
    %469 = vrot.lane.b32.xlu0 %v300, 112
    %v470 = vpop.permute.xlu0 %469
    %v473 = vsel %vm303, %v468, 0
    %475 = vmatpush.msra.mxu0 0.0
    %476 = vmatpush.msra.mxu0 0.0
    %477 = vmatpush.msra.mxu0 0.0
    %478 = vmatpush.msra.mxu0 0.0
    %479 = vmatpush.msra.mxu0 0.0
    %480 = vmatpush.msra.mxu0 0.0
    %481 = vmatpush.msra.mxu0 0.0
    %482 = vmatpush.msra.mxu0 0.0
    %483 = vmatpush.msra.mxu0 0.0
    %484 = vmatpush.msra.mxu0 0.0
    %485 = vmatpush.msra.mxu0 0.0
    %486 = vmatpush.msra.mxu0 0.0
    %487 = vmatpush.msra.mxu0 0.0
    %488 = vmatpush.msra.mxu0 0.0
    %489 = vmatpush.msra.mxu0 0.0
    %490 = vmatpush.msra.mxu0 %v470
    %491 = vmatmul.f32.gmra.mxu0 %v473
    %v492 = vpop.f32.mrf.mxu0
    %v493 = vadd.f32 0.0, %v492
    %494 = vdwg.mxu0
    %495 = vrot.lane.b32.xlu0 %v302, 104
    %v496 = vpop.permute.xlu0 %495
    %497 = vrot.lane.b32.xlu0 %v272, 104
    %v498 = vpop.permute.xlu0 %497
    %v499 = vsel %vm303, %v496, 0
    %v501 = vsel %vm303, %v498, 0
    %503 = vmatpush.xpose.msra.mxu0 0.0
    %504 = vmatpush.xpose.msra.mxu0 0.0
    %505 = vmatpush.xpose.msra.mxu0 0.0
    %506 = vmatpush.xpose.msra.mxu0 0.0
    %507 = vmatpush.xpose.msra.mxu0 0.0
    %508 = vmatpush.xpose.msra.mxu0 0.0
    %509 = vmatpush.xpose.msra.mxu0 0.0
    %510 = vmatpush.xpose.msra.mxu0 0.0
    %511 = vmatpush.xpose.msra.mxu0 0.0
    %512 = vmatpush.xpose.msra.mxu0 0.0
    %513 = vmatpush.xpose.msra.mxu0 0.0
    %514 = vmatpush.xpose.msra.mxu0 0.0
    %515 = vmatpush.xpose.msra.mxu0 0.0
    %516 = vmatpush.xpose.msra.mxu0 0.0
    %517 = vmatpush.xpose.msra.mxu0 0.0
    %518 = vmatpush.xpose.msra.mxu0 %v501
    %519 = vmatmul.f32.gmra.mxu0 %v499
    %v520 = vpop.f32.mrf.mxu0
    %v521 = vadd.f32 0.0, %v520
    %522 = vdwg.mxu0
    %v523 = vsel %vm303, %v521, -inf
    %524 = vmax.xlane.f32.xlu0 %v523
    %v525 = vpop.xlane.xlu0 %524
    %v526 = vsub.f32 %v521, %v525
    %v527 = vmul.f32 %v526, 1.442695
    %v528 = vpow.pop %v527
    %v529 = vsel %vm303, %v528, 0.0
    %530 = vadd.xlane.f32.xlu0 %v529
    %v531 = vpop.xlane.xlu0 %530
    %v532 = vrcp.pop %v531
    %v533 = vmul.f32 %v528, %v532
    %534 = vrot.lane.b32.xlu0 %v300, 104
    %v535 = vpop.permute.xlu0 %534
    %v538 = vsel %vm303, %v533, 0
    %540 = vmatpush.msra.mxu0 0.0
    %541 = vmatpush.msra.mxu0 0.0
    %542 = vmatpush.msra.mxu0 0.0
    %543 = vmatpush.msra.mxu0 0.0
    %544 = vmatpush.msra.mxu0 0.0
    %545 = vmatpush.msra.mxu0 0.0
    %546 = vmatpush.msra.mxu0 0.0
    %547 = vmatpush.msra.mxu0 0.0
    %548 = vmatpush.msra.mxu0 0.0
    %549 = vmatpush.msra.mxu0 0.0
    %550 = vmatpush.msra.mxu0 0.0
    %551 = vmatpush.msra.mxu0 0.0
    %552 = vmatpush.msra.mxu0 0.0
    %553 = vmatpush.msra.mxu0 0.0
    %554 = vmatpush.msra.mxu0 0.0
    %555 = vmatpush.msra.mxu0 %v535
    %556 = vmatmul.f32.gmra.mxu0 %v538
    %v557 = vpop.f32.mrf.mxu0
    %v558 = vadd.f32 0.0, %v557
    %559 = vdwg.mxu0
    %561 = vrot.lane.b32.xlu0 %v428, 8
    %v562 = vpop.permute.xlu0 %561
    %565 = vrot.lane.b32.xlu0 %v493, 16
    %v566 = vpop.permute.xlu0 %565
    %569 = vrot.lane.b32.xlu0 %v558, 24
    %v570 = vpop.permute.xlu0 %569
    %v572 = vsel %vm303, %v362, %v562
    %v573 = vsel %vm91, %v572, %v566
    %v574 = vsel %vm154, %v573, %v570
    %v575 = vld [vmem:[%s16] sm:$0xff]
    %v576 = vld [vmem:[%s16 + $0x8] sm:$0xff]
    %v577 = vld [vmem:[%s16 + $0x10] sm:$0xff]
    %v578 = vld [vmem:[%s16 + $0x18] sm:$0xff]
    %v579 = vld [vmem:[%s17] sm:$0x1]
    %v581 = vperm.slane %v579, 0
    %v584 = vsel %vm222, %v574, 0
    %586 = vmatpush.msra.mxu0 0.0
    %587 = vmatpush.msra.mxu0 0.0
    %588 = vmatpush.msra.mxu0 0.0
    %589 = vmatpush.msra.mxu0 0.0
    %590 = vmatpush.msra.mxu0 0.0
    %591 = vmatpush.msra.mxu0 0.0
    %592 = vmatpush.msra.mxu0 0.0
    %593 = vmatpush.msra.mxu0 0.0
    %594 = vmatpush.msra.mxu0 0.0
    %595 = vmatpush.msra.mxu0 0.0
    %596 = vmatpush.msra.mxu0 0.0
    %597 = vmatpush.msra.mxu0 0.0
    %598 = vmatpush.msra.mxu0 %v578
    %599 = vmatpush.msra.mxu0 %v577
    %600 = vmatpush.msra.mxu0 %v576
    %601 = vmatpush.msra.mxu0 %v575
    %602 = vmatmul.f32.gmra.mxu0 %v584
    %v603 = vpop.f32.mrf.mxu0
    %v604 = vadd.f32 %v581, %v603
    %605 = vdwg.mxu0
    %v606 = vadd.f32 %v213, %v604
    %v607 = vsel %vm222, %v606, 0.0
    %608 = vadd.xlane.f32.xlu0 %v607
    %v609 = vpop.xlane.xlu0 %608
    %v610 = vrcp.pop 32.0
    %v611 = vmul.f32 32.0, %v610
    %v612 = vsub.f32 1.0, %v611
    %v613 = vmul.f32 %v610, %v612
    %v614 = vadd.f32 %v610, %v613
    %vm615 = vweird.f32 %v610
    %v616 = vsel %vm615, %v610, %v614
    %v617 = vmul.f32 %v609, %v616
    %v618 = vsub.f32 %v606, %v617
    %v619 = vmul.f32 %v618, %v618
    %v620 = vsel %vm222, %v619, 0.0
    %621 = vadd.xlane.f32.xlu0 %v620
    %v622 = vpop.xlane.xlu0 %621
    %v623 = vmul.f32 %v622, %v616
    %v624 = vadd.f32 %v623, 1e-05
    %v625 = vrsqrt.pop %v624
    %v626 = vmul.f32 %v625, %v624
    %v627 = vmul.f32 %v626, %v625
    %v628 = vmul.f32 0.5, %v627
    %v629 = vsub.f32 1.5, %v628
    %v630 = vmul.f32 %v625, %v629
    %vm631 = vweird.f32 %v624
    %vm632 = vweird.f32 %v625
    %vm633 = vmor %vm631, %vm632
    %v634 = vsel %vm633, %v625, %v630
    %v635 = vmul.f32 %v618, %v634
    %v636 = vld [vmem:[%s18] sm:$0x1]
    %v638 = vperm.slane %v636, 0
    %v640 = vmul.f32 %v635, %v638
    %v641 = vld [vmem:[%s19] sm:$0x1]
    %v643 = vperm.slane %v641, 0
    %v645 = vadd.f32 %v640, %v643
    %v646 = vld [vmem:[%s20] sm:$0xff]
    %v647 = vld [vmem:[%s20 + $0x8] sm:$0xff]
    %v648 = vld [vmem:[%s20 + $0x10] sm:$0xff]
    %v649 = vld [vmem:[%s20 + $0x18] sm:$0xff]
    %v650 = vld [vmem:[%s20 + $0x20] sm:$0xff]
    %v651 = vld [vmem:[%s20 + $0x28] sm:$0xff]
    %v652 = vld [vmem:[%s20 + $0x30] sm:$0xff]
    %v653 = vld [vmem:[%s20 + $0x38] sm:$0xff]
    %v654 = vld [vmem:[%s20 + $0x40] sm:$0xff]
    %v655 = vld [vmem:[%s20 + $0x48] sm:$0xff]
    %v656 = vld [vmem:[%s20 + $0x50] sm:$0xff]
    %v657 = vld [vmem:[%s20 + $0x58] sm:$0xff]
    %v658 = vld [vmem:[%s20 + $0x60] sm:$0xff]
    %v659 = vld [vmem:[%s20 + $0x68] sm:$0xff]
    %v660 = vld [vmem:[%s20 + $0x70] sm:$0xff]
    %v661 = vld [vmem:[%s20 + $0x78] sm:$0xff]
    %v662 = vld [vmem:[%s20 + $0x80] sm:$0xff]
    %v663 = vld [vmem:[%s20 + $0x88] sm:$0xff]
    %v664 = vld [vmem:[%s20 + $0x90] sm:$0xff]
    %v665 = vld [vmem:[%s20 + $0x98] sm:$0xff]
    %v666 = vld [vmem:[%s20 + $0xa0] sm:$0xff]
    %v667 = vld [vmem:[%s20 + $0xa8] sm:$0xff]
    %v668 = vld [vmem:[%s20 + $0xb0] sm:$0xff]
    %v669 = vld [vmem:[%s20 + $0xb8] sm:$0xff]
    %v670 = vld [vmem:[%s20 + $0xc0] sm:$0xff]
    %v671 = vld [vmem:[%s20 + $0xc8] sm:$0xff]
    %v672 = vld [vmem:[%s20 + $0xd0] sm:$0xff]
    %v673 = vld [vmem:[%s20 + $0xd8] sm:$0xff]
    %v674 = vld [vmem:[%s20 + $0xe0] sm:$0xff]
    %v675 = vld [vmem:[%s20 + $0xe8] sm:$0xff]
    %v676 = vld [vmem:[%s20 + $0xf0] sm:$0xff]
    %v677 = vld [vmem:[%s20 + $0xf8] sm:$0xff]
    %v678 = vld [vmem:[%s20 + $0x100] sm:$0xff]
    %v679 = vld [vmem:[%s20 + $0x108] sm:$0xff]
    %v680 = vld [vmem:[%s20 + $0x110] sm:$0xff]
    %v681 = vld [vmem:[%s20 + $0x118] sm:$0xff]
    %v682 = vld [vmem:[%s20 + $0x120] sm:$0xff]
    %v683 = vld [vmem:[%s20 + $0x128] sm:$0xff]
    %v684 = vld [vmem:[%s20 + $0x130] sm:$0xff]
    %v685 = vld [vmem:[%s20 + $0x138] sm:$0xff]
    %v686 = vld [vmem:[%s20 + $0x140] sm:$0xff]
    %v687 = vld [vmem:[%s20 + $0x148] sm:$0xff]
    %v688 = vld [vmem:[%s20 + $0x150] sm:$0xff]
    %v689 = vld [vmem:[%s20 + $0x158] sm:$0xff]
    %v690 = vld [vmem:[%s20 + $0x160] sm:$0xff]
    %v691 = vld [vmem:[%s20 + $0x168] sm:$0xff]
    %v692 = vld [vmem:[%s20 + $0x170] sm:$0xff]
    %v693 = vld [vmem:[%s20 + $0x178] sm:$0xff]
    %v694 = vld [vmem:[%s20 + $0x180] sm:$0xff]
    %v695 = vld [vmem:[%s20 + $0x188] sm:$0xff]
    %v696 = vld [vmem:[%s20 + $0x190] sm:$0xff]
    %v697 = vld [vmem:[%s20 + $0x198] sm:$0xff]
    %v698 = vld [vmem:[%s20 + $0x1a0] sm:$0xff]
    %v699 = vld [vmem:[%s20 + $0x1a8] sm:$0xff]
    %v700 = vld [vmem:[%s20 + $0x1b0] sm:$0xff]
    %v701 = vld [vmem:[%s20 + $0x1b8] sm:$0xff]
    %v702 = vld [vmem:[%s20 + $0x1c0] sm:$0xff]
    %v703 = vld [vmem:[%s20 + $0x1c8] sm:$0xff]
    %v704 = vld [vmem:[%s20 + $0x1d0] sm:$0xff]
    %v705 = vld [vmem:[%s20 + $0x1d8] sm:$0xff]
    %v706 = vld [vmem:[%s20 + $0x1e0] sm:$0xff]
    %v707 = vld [vmem:[%s20 + $0x1e8] sm:$0xff]
    %v708 = vld [vmem:[%s20 + $0x1f0] sm:$0xff]
    %v709 = vld [vmem:[%s20 + $0x1f8] sm:$0xff]
    %v710 = vld [vmem:[%s21] sm:$0xff]
    %v711 = vld [vmem:[%s21 + $0x8] sm:$0xff]
    %v714 = vperm.slane %v710, 0
    %v715 = vperm.slane %v710, 1
    %v716 = vperm.slane %v710, 2
    %v717 = vperm.slane %v710, 3
    %v718 = vperm.slane %v710, 4
    %v719 = vperm.slane %v710, 5
    %v720 = vperm.slane %v710, 6
    %v721 = vperm.slane %v710, 7
    %v722 = vperm.slane %v711, 0
    %v723 = vperm.slane %v711, 1
    %v724 = vperm.slane %v711, 2
    %v725 = vperm.slane %v711, 3
    %v726 = vperm.slane %v711, 4
    %v727 = vperm.slane %v711, 5
    %v728 = vperm.slane %v711, 6
    %v729 = vperm.slane %v711, 7
    %v747 = vsel %vm222, %v645, 0
    %749 = vmatpush.msra.mxu0 0.0
    %750 = vmatpush.msra.mxu0 0.0
    %751 = vmatpush.msra.mxu0 0.0
    %752 = vmatpush.msra.mxu0 0.0
    %753 = vmatpush.msra.mxu0 0.0
    %754 = vmatpush.msra.mxu0 0.0
    %755 = vmatpush.msra.mxu0 0.0
    %756 = vmatpush.msra.mxu0 0.0
    %757 = vmatpush.msra.mxu0 0.0
    %758 = vmatpush.msra.mxu0 0.0
    %759 = vmatpush.msra.mxu0 0.0
    %760 = vmatpush.msra.mxu0 0.0
    %761 = vmatpush.msra.mxu0 %v694
    %762 = vmatpush.msra.mxu0 %v678
    %763 = vmatpush.msra.mxu0 %v662
    %764 = vmatpush.msra.mxu0 %v646
    %765 = vmatmul.f32.gmra.mxu0 %v747
    %v766 = vpop.f32.mrf.mxu0
    %v767 = vadd.f32 %v714, %v766
    %768 = vdwg.mxu0
    %769 = vmatpush.msra.mxu0 0.0
    %770 = vmatpush.msra.mxu0 0.0
    %771 = vmatpush.msra.mxu0 0.0
    %772 = vmatpush.msra.mxu0 0.0
    %773 = vmatpush.msra.mxu0 0.0
    %774 = vmatpush.msra.mxu0 0.0
    %775 = vmatpush.msra.mxu0 0.0
    %776 = vmatpush.msra.mxu0 0.0
    %777 = vmatpush.msra.mxu0 0.0
    %778 = vmatpush.msra.mxu0 0.0
    %779 = vmatpush.msra.mxu0 0.0
    %780 = vmatpush.msra.mxu0 0.0
    %781 = vmatpush.msra.mxu0 %v695
    %782 = vmatpush.msra.mxu0 %v679
    %783 = vmatpush.msra.mxu0 %v663
    %784 = vmatpush.msra.mxu0 %v647
    %785 = vmatmul.f32.gmra.mxu0 %v747
    %v786 = vpop.f32.mrf.mxu0
    %v787 = vadd.f32 %v715, %v786
    %788 = vdwg.mxu0
    %789 = vmatpush.msra.mxu0 0.0
    %790 = vmatpush.msra.mxu0 0.0
    %791 = vmatpush.msra.mxu0 0.0
    %792 = vmatpush.msra.mxu0 0.0
    %793 = vmatpush.msra.mxu0 0.0
    %794 = vmatpush.msra.mxu0 0.0
    %795 = vmatpush.msra.mxu0 0.0
    %796 = vmatpush.msra.mxu0 0.0
    %797 = vmatpush.msra.mxu0 0.0
    %798 = vmatpush.msra.mxu0 0.0
    %799 = vmatpush.msra.mxu0 0.0
    %800 = vmatpush.msra.mxu0 0.0
    %801 = vmatpush.msra.mxu0 %v696
    %802 = vmatpush.msra.mxu0 %v680
    %803 = vmatpush.msra.mxu0 %v664
    %804 = vmatpush.msra.mxu0 %v648
    %805 = vmatmul.f32.gmra.mxu0 %v747
    %v806 = vpop.f32.mrf.mxu0
    %v807 = vadd.f32 %v716, %v806
    %808 = vdwg.mxu0
    %809 = vmatpush.msra.mxu0 0.0
    %810 = vmatpush.msra.mxu0 0.0
    %811 = vmatpush.msra.mxu0 0.0
    %812 = vmatpush.msra.mxu0 0.0
    %813 = vmatpush.msra.mxu0 0.0
    %814 = vmatpush.msra.mxu0 0.0
    %815 = vmatpush.msra.mxu0 0.0
    %816 = vmatpush.msra.mxu0 0.0
    %817 = vmatpush.msra.mxu0 0.0
    %818 = vmatpush.msra.mxu0 0.0
    %819 = vmatpush.msra.mxu0 0.0
    %820 = vmatpush.msra.mxu0 0.0
    %821 = vmatpush.msra.mxu0 %v697
    %822 = vmatpush.msra.mxu0 %v681
    %823 = vmatpush.msra.mxu0 %v665
    %824 = vmatpush.msra.mxu0 %v649
    %825 = vmatmul.f32.gmra.mxu0 %v747
    %v826 = vpop.f32.mrf.mxu0
    %v827 = vadd.f32 %v717, %v826
    %828 = vdwg.mxu0
    %829 = vmatpush.msra.mxu0 0.0
    %830 = vmatpush.msra.mxu0 0.0
    %831 = vmatpush.msra.mxu0 0.0
    %832 = vmatpush.msra.mxu0 0.0
    %833 = vmatpush.msra.mxu0 0.0
    %834 = vmatpush.msra.mxu0 0.0
    %835 = vmatpush.msra.mxu0 0.0
    %836 = vmatpush.msra.mxu0 0.0
    %837 = vmatpush.msra.mxu0 0.0
    %838 = vmatpush.msra.mxu0 0.0
    %839 = vmatpush.msra.mxu0 0.0
    %840 = vmatpush.msra.mxu0 0.0
    %841 = vmatpush.msra.mxu0 %v698
    %842 = vmatpush.msra.mxu0 %v682
    %843 = vmatpush.msra.mxu0 %v666
    %844 = vmatpush.msra.mxu0 %v650
    %845 = vmatmul.f32.gmra.mxu0 %v747
    %v846 = vpop.f32.mrf.mxu0
    %v847 = vadd.f32 %v718, %v846
    %848 = vdwg.mxu0
    %849 = vmatpush.msra.mxu0 0.0
    %850 = vmatpush.msra.mxu0 0.0
    %851 = vmatpush.msra.mxu0 0.0
    %852 = vmatpush.msra.mxu0 0.0
    %853 = vmatpush.msra.mxu0 0.0
    %854 = vmatpush.msra.mxu0 0.0
    %855 = vmatpush.msra.mxu0 0.0
    %856 = vmatpush.msra.mxu0 0.0
    %857 = vmatpush.msra.mxu0 0.0
    %858 = vmatpush.msra.mxu0 0.0
    %859 = vmatpush.msra.mxu0 0.0
    %860 = vmatpush.msra.mxu0 0.0
    %861 = vmatpush.msra.mxu0 %v699
    %862 = vmatpush.msra.mxu0 %v683
    %863 = vmatpush.msra.mxu0 %v667
    %864 = vmatpush.msra.mxu0 %v651
    %865 = vmatmul.f32.gmra.mxu0 %v747
    %v866 = vpop.f32.mrf.mxu0
    %v867 = vadd.f32 %v719, %v866
    %868 = vdwg.mxu0
    %869 = vmatpush.msra.mxu0 0.0
    %870 = vmatpush.msra.mxu0 0.0
    %871 = vmatpush.msra.mxu0 0.0
    %872 = vmatpush.msra.mxu0 0.0
    %873 = vmatpush.msra.mxu0 0.0
    %874 = vmatpush.msra.mxu0 0.0
    %875 = vmatpush.msra.mxu0 0.0
    %876 = vmatpush.msra.mxu0 0.0
    %877 = vmatpush.msra.mxu0 0.0
    %878 = vmatpush.msra.mxu0 0.0
    %879 = vmatpush.msra.mxu0 0.0
    %880 = vmatpush.msra.mxu0 0.0
    %881 = vmatpush.msra.mxu0 %v700
    %882 = vmatpush.msra.mxu0 %v684
    %883 = vmatpush.msra.mxu0 %v668
    %884 = vmatpush.msra.mxu0 %v652
    %885 = vmatmul.f32.gmra.mxu0 %v747
    %v886 = vpop.f32.mrf.mxu0
    %v887 = vadd.f32 %v720, %v886
    %888 = vdwg.mxu0
    %889 = vmatpush.msra.mxu0 0.0
    %890 = vmatpush.msra.mxu0 0.0
    %891 = vmatpush.msra.mxu0 0.0
    %892 = vmatpush.msra.mxu0 0.0
    %893 = vmatpush.msra.mxu0 0.0
    %894 = vmatpush.msra.mxu0 0.0
    %895 = vmatpush.msra.mxu0 0.0
    %896 = vmatpush.msra.mxu0 0.0
    %897 = vmatpush.msra.mxu0 0.0
    %898 = vmatpush.msra.mxu0 0.0
    %899 = vmatpush.msra.mxu0 0.0
    %900 = vmatpush.msra.mxu0 0.0
    %901 = vmatpush.msra.mxu0 %v701
    %902 = vmatpush.msra.mxu0 %v685
    %903 = vmatpush.msra.mxu0 %v669
    %904 = vmatpush.msra.mxu0 %v653
    %905 = vmatmul.f32.gmra.mxu0 %v747
    %v906 = vpop.f32.mrf.mxu0
    %v907 = vadd.f32 %v721, %v906
    %908 = vdwg.mxu0
    %909 = vmatpush.msra.mxu0 0.0
    %910 = vmatpush.msra.mxu0 0.0
    %911 = vmatpush.msra.mxu0 0.0
    %912 = vmatpush.msra.mxu0 0.0
    %913 = vmatpush.msra.mxu0 0.0
    %914 = vmatpush.msra.mxu0 0.0
    %915 = vmatpush.msra.mxu0 0.0
    %916 = vmatpush.msra.mxu0 0.0
    %917 = vmatpush.msra.mxu0 0.0
    %918 = vmatpush.msra.mxu0 0.0
    %919 = vmatpush.msra.mxu0 0.0
    %920 = vmatpush.msra.mxu0 0.0
    %921 = vmatpush.msra.mxu0 %v702
    %922 = vmatpush.msra.mxu0 %v686
    %923 = vmatpush.msra.mxu0 %v670
    %924 = vmatpush.msra.mxu0 %v654
    %925 = vmatmul.f32.gmra.mxu0 %v747
    %v926 = vpop.f32.mrf.mxu0
    %v927 = vadd.f32 %v722, %v926
    %928 = vdwg.mxu0
    %929 = vmatpush.msra.mxu0 0.0
    %930 = vmatpush.msra.mxu0 0.0
    %931 = vmatpush.msra.mxu0 0.0
    %932 = vmatpush.msra.mxu0 0.0
    %933 = vmatpush.msra.mxu0 0.0
    %934 = vmatpush.msra.mxu0 0.0
    %935 = vmatpush.msra.mxu0 0.0
    %936 = vmatpush.msra.mxu0 0.0
    %937 = vmatpush.msra.mxu0 0.0
    %938 = vmatpush.msra.mxu0 0.0
    %939 = vmatpush.msra.mxu0 0.0
    %940 = vmatpush.msra.mxu0 0.0
    %941 = vmatpush.msra.mxu0 %v703
    %942 = vmatpush.msra.mxu0 %v687
    %943 = vmatpush.msra.mxu0 %v671
    %944 = vmatpush.msra.mxu0 %v655
    %945 = vmatmul.f32.gmra.mxu0 %v747
    %v946 = vpop.f32.mrf.mxu0
    %v947 = vadd.f32 %v723, %v946
    %948 = vdwg.mxu0
    %949 = vmatpush.msra.mxu0 0.0
    %950 = vmatpush.msra.mxu0 0.0
    %951 = vmatpush.msra.mxu0 0.0
    %952 = vmatpush.msra.mxu0 0.0
    %953 = vmatpush.msra.mxu0 0.0
    %954 = vmatpush.msra.mxu0 0.0
    %955 = vmatpush.msra.mxu0 0.0
    %956 = vmatpush.msra.mxu0 0.0
    %957 = vmatpush.msra.mxu0 0.0
    %958 = vmatpush.msra.mxu0 0.0
    %959 = vmatpush.msra.mxu0 0.0
    %960 = vmatpush.msra.mxu0 0.0
    %961 = vmatpush.msra.mxu0 %v704
    %962 = vmatpush.msra.mxu0 %v688
    %963 = vmatpush.msra.mxu0 %v672
    %964 = vmatpush.msra.mxu0 %v656
    %965 = vmatmul.f32.gmra.mxu0 %v747
    %v966 = vpop.f32.mrf.mxu0
    %v967 = vadd.f32 %v724, %v966
    %968 = vdwg.mxu0
    %969 = vmatpush.msra.mxu0 0.0
    %970 = vmatpush.msra.mxu0 0.0
    %971 = vmatpush.msra.mxu0 0.0
    %972 = vmatpush.msra.mxu0 0.0
    %973 = vmatpush.msra.mxu0 0.0
    %974 = vmatpush.msra.mxu0 0.0
    %975 = vmatpush.msra.mxu0 0.0
    %976 = vmatpush.msra.mxu0 0.0
    %977 = vmatpush.msra.mxu0 0.0
    %978 = vmatpush.msra.mxu0 0.0
    %979 = vmatpush.msra.mxu0 0.0
    %980 = vmatpush.msra.mxu0 0.0
    %981 = vmatpush.msra.mxu0 %v705
    %982 = vmatpush.msra.mxu0 %v689
    %983 = vmatpush.msra.mxu0 %v673
    %984 = vmatpush.msra.mxu0 %v657
    %985 = vmatmul.f32.gmra.mxu0 %v747
    %v986 = vpop.f32.mrf.mxu0
    %v987 = vadd.f32 %v725, %v986
    %988 = vdwg.mxu0
    %989 = vmatpush.msra.mxu0 0.0
    %990 = vmatpush.msra.mxu0 0.0
    %991 = vmatpush.msra.mxu0 0.0
    %992 = vmatpush.msra.mxu0 0.0
    %993 = vmatpush.msra.mxu0 0.0
    %994 = vmatpush.msra.mxu0 0.0
    %995 = vmatpush.msra.mxu0 0.0
    %996 = vmatpush.msra.mxu0 0.0
    %997 = vmatpush.msra.mxu0 0.0
    %998 = vmatpush.msra.mxu0 0.0
    %999 = vmatpush.msra.mxu0 0.0
    %1000 = vmatpush.msra.mxu0 0.0
    %1001 = vmatpush.msra.mxu0 %v706
    %1002 = vmatpush.msra.mxu0 %v690
    %1003 = vmatpush.msra.mxu0 %v674
    %1004 = vmatpush.msra.mxu0 %v658
    %1005 = vmatmul.f32.gmra.mxu0 %v747
    %v1006 = vpop.f32.mrf.mxu0
    %v1007 = vadd.f32 %v726, %v1006
    %1008 = vdwg.mxu0
    %1009 = vmatpush.msra.mxu0 0.0
    %1010 = vmatpush.msra.mxu0 0.0
    %1011 = vmatpush.msra.mxu0 0.0
    %1012 = vmatpush.msra.mxu0 0.0
    %1013 = vmatpush.msra.mxu0 0.0
    %1014 = vmatpush.msra.mxu0 0.0
    %1015 = vmatpush.msra.mxu0 0.0
    %1016 = vmatpush.msra.mxu0 0.0
    %1017 = vmatpush.msra.mxu0 0.0
    %1018 = vmatpush.msra.mxu0 0.0
    %1019 = vmatpush.msra.mxu0 0.0
    %1020 = vmatpush.msra.mxu0 0.0
    %1021 = vmatpush.msra.mxu0 %v707
    %1022 = vmatpush.msra.mxu0 %v691
    %1023 = vmatpush.msra.mxu0 %v675
    %1024 = vmatpush.msra.mxu0 %v659
    %1025 = vmatmul.f32.gmra.mxu0 %v747
    %v1026 = vpop.f32.mrf.mxu0
    %v1027 = vadd.f32 %v727, %v1026
    %1028 = vdwg.mxu0
    %1029 = vmatpush.msra.mxu0 0.0
    %1030 = vmatpush.msra.mxu0 0.0
    %1031 = vmatpush.msra.mxu0 0.0
    %1032 = vmatpush.msra.mxu0 0.0
    %1033 = vmatpush.msra.mxu0 0.0
    %1034 = vmatpush.msra.mxu0 0.0
    %1035 = vmatpush.msra.mxu0 0.0
    %1036 = vmatpush.msra.mxu0 0.0
    %1037 = vmatpush.msra.mxu0 0.0
    %1038 = vmatpush.msra.mxu0 0.0
    %1039 = vmatpush.msra.mxu0 0.0
    %1040 = vmatpush.msra.mxu0 0.0
    %1041 = vmatpush.msra.mxu0 %v708
    %1042 = vmatpush.msra.mxu0 %v692
    %1043 = vmatpush.msra.mxu0 %v676
    %1044 = vmatpush.msra.mxu0 %v660
    %1045 = vmatmul.f32.gmra.mxu0 %v747
    %v1046 = vpop.f32.mrf.mxu0
    %v1047 = vadd.f32 %v728, %v1046
    %1048 = vdwg.mxu0
    %1049 = vmatpush.msra.mxu0 0.0
    %1050 = vmatpush.msra.mxu0 0.0
    %1051 = vmatpush.msra.mxu0 0.0
    %1052 = vmatpush.msra.mxu0 0.0
    %1053 = vmatpush.msra.mxu0 0.0
    %1054 = vmatpush.msra.mxu0 0.0
    %1055 = vmatpush.msra.mxu0 0.0
    %1056 = vmatpush.msra.mxu0 0.0
    %1057 = vmatpush.msra.mxu0 0.0
    %1058 = vmatpush.msra.mxu0 0.0
    %1059 = vmatpush.msra.mxu0 0.0
    %1060 = vmatpush.msra.mxu0 0.0
    %1061 = vmatpush.msra.mxu0 %v709
    %1062 = vmatpush.msra.mxu0 %v693
    %1063 = vmatpush.msra.mxu0 %v677
    %1064 = vmatpush.msra.mxu0 %v661
    %1065 = vmatmul.f32.gmra.mxu0 %v747
    %v1066 = vpop.f32.mrf.mxu0
    %v1067 = vadd.f32 %v729, %v1066
    %1068 = vdwg.mxu0
    %v1069 = vmax.f32 %v767, 0.0
    %v1070 = vmax.f32 %v787, 0.0
    %v1071 = vmax.f32 %v807, 0.0
    %v1072 = vmax.f32 %v827, 0.0
    %v1073 = vmax.f32 %v847, 0.0
    %v1074 = vmax.f32 %v867, 0.0
    %v1075 = vmax.f32 %v887, 0.0
    %v1076 = vmax.f32 %v907, 0.0
    %v1077 = vmax.f32 %v927, 0.0
    %v1078 = vmax.f32 %v947, 0.0
    %v1079 = vmax.f32 %v967, 0.0
    %v1080 = vmax.f32 %v987, 0.0
    %v1081 = vmax.f32 %v1007, 0.0
    %v1082 = vmax.f32 %v1027, 0.0
    %v1083 = vmax.f32 %v1047, 0.0
    %v1084 = vmax.f32 %v1067, 0.0
    %v1085 = vld [vmem:[%s22] sm:$0xff]
    %v1086 = vld [vmem:[%s22 + $0x8] sm:$0xff]
    %v1087 = vld [vmem:[%s22 + $0x10] sm:$0xff]
    %v1088 = vld [vmem:[%s22 + $0x18] sm:$0xff]
    %v1089 = vld [vmem:[%s22 + $0x20] sm:$0xff]
    %v1090 = vld [vmem:[%s22 + $0x28] sm:$0xff]
    %v1091 = vld [vmem:[%s22 + $0x30] sm:$0xff]
    %v1092 = vld [vmem:[%s22 + $0x38] sm:$0xff]
    %v1093 = vld [vmem:[%s22 + $0x40] sm:$0xff]
    %v1094 = vld [vmem:[%s22 + $0x48] sm:$0xff]
    %v1095 = vld [vmem:[%s22 + $0x50] sm:$0xff]
    %v1096 = vld [vmem:[%s22 + $0x58] sm:$0xff]
    %v1097 = vld [vmem:[%s22 + $0x60] sm:$0xff]
    %v1098 = vld [vmem:[%s22 + $0x68] sm:$0xff]
    %v1099 = vld [vmem:[%s22 + $0x70] sm:$0xff]
    %v1100 = vld [vmem:[%s22 + $0x78] sm:$0xff]
    %v1101 = vld [vmem:[%s22 + $0x80] sm:$0xff]
    %v1102 = vld [vmem:[%s22 + $0x88] sm:$0xff]
    %v1103 = vld [vmem:[%s22 + $0x90] sm:$0xff]
    %v1104 = vld [vmem:[%s22 + $0x98] sm:$0xff]
    %v1105 = vld [vmem:[%s22 + $0xa0] sm:$0xff]
    %v1106 = vld [vmem:[%s22 + $0xa8] sm:$0xff]
    %v1107 = vld [vmem:[%s22 + $0xb0] sm:$0xff]
    %v1108 = vld [vmem:[%s22 + $0xb8] sm:$0xff]
    %v1109 = vld [vmem:[%s22 + $0xc0] sm:$0xff]
    %v1110 = vld [vmem:[%s22 + $0xc8] sm:$0xff]
    %v1111 = vld [vmem:[%s22 + $0xd0] sm:$0xff]
    %v1112 = vld [vmem:[%s22 + $0xd8] sm:$0xff]
    %v1113 = vld [vmem:[%s22 + $0xe0] sm:$0xff]
    %v1114 = vld [vmem:[%s22 + $0xe8] sm:$0xff]
    %v1115 = vld [vmem:[%s22 + $0xf0] sm:$0xff]
    %v1116 = vld [vmem:[%s22 + $0xf8] sm:$0xff]
    %v1117 = vld [vmem:[%s22 + $0x100] sm:$0xff]
    %v1118 = vld [vmem:[%s22 + $0x108] sm:$0xff]
    %v1119 = vld [vmem:[%s22 + $0x110] sm:$0xff]
    %v1120 = vld [vmem:[%s22 + $0x118] sm:$0xff]
    %v1121 = vld [vmem:[%s22 + $0x120] sm:$0xff]
    %v1122 = vld [vmem:[%s22 + $0x128] sm:$0xff]
    %v1123 = vld [vmem:[%s22 + $0x130] sm:$0xff]
    %v1124 = vld [vmem:[%s22 + $0x138] sm:$0xff]
    %v1125 = vld [vmem:[%s22 + $0x140] sm:$0xff]
    %v1126 = vld [vmem:[%s22 + $0x148] sm:$0xff]
    %v1127 = vld [vmem:[%s22 + $0x150] sm:$0xff]
    %v1128 = vld [vmem:[%s22 + $0x158] sm:$0xff]
    %v1129 = vld [vmem:[%s22 + $0x160] sm:$0xff]
    %v1130 = vld [vmem:[%s22 + $0x168] sm:$0xff]
    %v1131 = vld [vmem:[%s22 + $0x170] sm:$0xff]
    %v1132 = vld [vmem:[%s22 + $0x178] sm:$0xff]
    %v1133 = vld [vmem:[%s22 + $0x180] sm:$0xff]
    %v1134 = vld [vmem:[%s22 + $0x188] sm:$0xff]
    %v1135 = vld [vmem:[%s22 + $0x190] sm:$0xff]
    %v1136 = vld [vmem:[%s22 + $0x198] sm:$0xff]
    %v1137 = vld [vmem:[%s22 + $0x1a0] sm:$0xff]
    %v1138 = vld [vmem:[%s22 + $0x1a8] sm:$0xff]
    %v1139 = vld [vmem:[%s22 + $0x1b0] sm:$0xff]
    %v1140 = vld [vmem:[%s22 + $0x1b8] sm:$0xff]
    %v1141 = vld [vmem:[%s22 + $0x1c0] sm:$0xff]
    %v1142 = vld [vmem:[%s22 + $0x1c8] sm:$0xff]
    %v1143 = vld [vmem:[%s22 + $0x1d0] sm:$0xff]
    %v1144 = vld [vmem:[%s22 + $0x1d8] sm:$0xff]
    %v1145 = vld [vmem:[%s22 + $0x1e0] sm:$0xff]
    %v1146 = vld [vmem:[%s22 + $0x1e8] sm:$0xff]
    %v1147 = vld [vmem:[%s22 + $0x1f0] sm:$0xff]
    %v1148 = vld [vmem:[%s22 + $0x1f8] sm:$0xff]
    %v1149 = vld [vmem:[%s22 + $0x200] sm:$0xff]
    %v1150 = vld [vmem:[%s22 + $0x208] sm:$0xff]
    %v1151 = vld [vmem:[%s22 + $0x210] sm:$0xff]
    %v1152 = vld [vmem:[%s22 + $0x218] sm:$0xff]
    %v1153 = vld [vmem:[%s22 + $0x220] sm:$0xff]
    %v1154 = vld [vmem:[%s22 + $0x228] sm:$0xff]
    %v1155 = vld [vmem:[%s22 + $0x230] sm:$0xff]
    %v1156 = vld [vmem:[%s22 + $0x238] sm:$0xff]
    %v1157 = vld [vmem:[%s22 + $0x240] sm:$0xff]
    %v1158 = vld [vmem:[%s22 + $0x248] sm:$0xff]
    %v1159 = vld [vmem:[%s22 + $0x250] sm:$0xff]
    %v1160 = vld [vmem:[%s22 + $0x258] sm:$0xff]
    %v1161 = vld [vmem:[%s22 + $0x260] sm:$0xff]
    %v1162 = vld [vmem:[%s22 + $0x268] sm:$0xff]
    %v1163 = vld [vmem:[%s22 + $0x270] sm:$0xff]
    %v1164 = vld [vmem:[%s22 + $0x278] sm:$0xff]
    %v1165 = vld [vmem:[%s22 + $0x280] sm:$0xff]
    %v1166 = vld [vmem:[%s22 + $0x288] sm:$0xff]
    %v1167 = vld [vmem:[%s22 + $0x290] sm:$0xff]
    %v1168 = vld [vmem:[%s22 + $0x298] sm:$0xff]
    %v1169 = vld [vmem:[%s22 + $0x2a0] sm:$0xff]
    %v1170 = vld [vmem:[%s22 + $0x2a8] sm:$0xff]
    %v1171 = vld [vmem:[%s22 + $0x2b0] sm:$0xff]
    %v1172 = vld [vmem:[%s22 + $0x2b8] sm:$0xff]
    %v1173 = vld [vmem:[%s22 + $0x2c0] sm:$0xff]
    %v1174 = vld [vmem:[%s22 + $0x2c8] sm:$0xff]
    %v1175 = vld [vmem:[%s22 + $0x2d0] sm:$0xff]
    %v1176 = vld [vmem:[%s22 + $0x2d8] sm:$0xff]
    %v1177 = vld [vmem:[%s22 + $0x2e0] sm:$0xff]
    %v1178 = vld [vmem:[%s22 + $0x2e8] sm:$0xff]
    %v1179 = vld [vmem:[%s22 + $0x2f0] sm:$0xff]
    %v1180 = vld [vmem:[%s22 + $0x2f8] sm:$0xff]
    %v1181 = vld [vmem:[%s22 + $0x300] sm:$0xff]
    %v1182 = vld [vmem:[%s22 + $0x308] sm:$0xff]
    %v1183 = vld [vmem:[%s22 + $0x310] sm:$0xff]
    %v1184 = vld [vmem:[%s22 + $0x318] sm:$0xff]
    %v1185 = vld [vmem:[%s22 + $0x320] sm:$0xff]
    %v1186 = vld [vmem:[%s22 + $0x328] sm:$0xff]
    %v1187 = vld [vmem:[%s22 + $0x330] sm:$0xff]
    %v1188 = vld [vmem:[%s22 + $0x338] sm:$0xff]
    %v1189 = vld [vmem:[%s22 + $0x340] sm:$0xff]
    %v1190 = vld [vmem:[%s22 + $0x348] sm:$0xff]
    %v1191 = vld [vmem:[%s22 + $0x350] sm:$0xff]
    %v1192 = vld [vmem:[%s22 + $0x358] sm:$0xff]
    %v1193 = vld [vmem:[%s22 + $0x360] sm:$0xff]
    %v1194 = vld [vmem:[%s22 + $0x368] sm:$0xff]
    %v1195 = vld [vmem:[%s22 + $0x370] sm:$0xff]
    %v1196 = vld [vmem:[%s22 + $0x378] sm:$0xff]
    %v1197 = vld [vmem:[%s22 + $0x380] sm:$0xff]
    %v1198 = vld [vmem:[%s22 + $0x388] sm:$0xff]
    %v1199 = vld [vmem:[%s22 + $0x390] sm:$0xff]
    %v1200 = vld [vmem:[%s22 + $0x398] sm:$0xff]
    %v1201 = vld [vmem:[%s22 + $0x3a0] sm:$0xff]
    %v1202 = vld [vmem:[%s22 + $0x3a8] sm:$0xff]
    %v1203 = vld [vmem:[%s22 + $0x3b0] sm:$0xff]
    %v1204 = vld [vmem:[%s22 + $0x3b8] sm:$0xff]
    %v1205 = vld [vmem:[%s22 + $0x3c0] sm:$0xff]
    %v1206 = vld [vmem:[%s22 + $0x3c8] sm:$0xff]
    %v1207 = vld [vmem:[%s22 + $0x3d0] sm:$0xff]
    %v1208 = vld [vmem:[%s22 + $0x3d8] sm:$0xff]
    %v1209 = vld [vmem:[%s22 + $0x3e0] sm:$0xff]
    %v1210 = vld [vmem:[%s22 + $0x3e8] sm:$0xff]
    %v1211 = vld [vmem:[%s22 + $0x3f0] sm:$0xff]
    %v1212 = vld [vmem:[%s22 + $0x3f8] sm:$0xff]
    %v1213 = vld [vmem:[%s22 + $0x400] sm:$0xff]
    %v1214 = vld [vmem:[%s22 + $0x408] sm:$0xff]
    %v1215 = vld [vmem:[%s22 + $0x410] sm:$0xff]
    %v1216 = vld [vmem:[%s22 + $0x418] sm:$0xff]
    %v1217 = vld [vmem:[%s22 + $0x420] sm:$0xff]
    %v1218 = vld [vmem:[%s22 + $0x428] sm:$0xff]
    %v1219 = vld [vmem:[%s22 + $0x430] sm:$0xff]
    %v1220 = vld [vmem:[%s22 + $0x438] sm:$0xff]
    %v1221 = vld [vmem:[%s22 + $0x440] sm:$0xff]
    %v1222 = vld [vmem:[%s22 + $0x448] sm:$0xff]
    %v1223 = vld [vmem:[%s22 + $0x450] sm:$0xff]
    %v1224 = vld [vmem:[%s22 + $0x458] sm:$0xff]
    %v1225 = vld [vmem:[%s22 + $0x460] sm:$0xff]
    %v1226 = vld [vmem:[%s22 + $0x468] sm:$0xff]
    %v1227 = vld [vmem:[%s22 + $0x470] sm:$0xff]
    %v1228 = vld [vmem:[%s22 + $0x478] sm:$0xff]
    %v1229 = vld [vmem:[%s22 + $0x480] sm:$0xff]
    %v1230 = vld [vmem:[%s22 + $0x488] sm:$0xff]
    %v1231 = vld [vmem:[%s22 + $0x490] sm:$0xff]
    %v1232 = vld [vmem:[%s22 + $0x498] sm:$0xff]
    %v1233 = vld [vmem:[%s22 + $0x4a0] sm:$0xff]
    %v1234 = vld [vmem:[%s22 + $0x4a8] sm:$0xff]
    %v1235 = vld [vmem:[%s22 + $0x4b0] sm:$0xff]
    %v1236 = vld [vmem:[%s22 + $0x4b8] sm:$0xff]
    %v1237 = vld [vmem:[%s22 + $0x4c0] sm:$0xff]
    %v1238 = vld [vmem:[%s22 + $0x4c8] sm:$0xff]
    %v1239 = vld [vmem:[%s22 + $0x4d0] sm:$0xff]
    %v1240 = vld [vmem:[%s22 + $0x4d8] sm:$0xff]
    %v1241 = vld [vmem:[%s22 + $0x4e0] sm:$0xff]
    %v1242 = vld [vmem:[%s22 + $0x4e8] sm:$0xff]
    %v1243 = vld [vmem:[%s22 + $0x4f0] sm:$0xff]
    %v1244 = vld [vmem:[%s22 + $0x4f8] sm:$0xff]
    %v1245 = vld [vmem:[%s22 + $0x500] sm:$0xff]
    %v1246 = vld [vmem:[%s22 + $0x508] sm:$0xff]
    %v1247 = vld [vmem:[%s22 + $0x510] sm:$0xff]
    %v1248 = vld [vmem:[%s22 + $0x518] sm:$0xff]
    %v1249 = vld [vmem:[%s22 + $0x520] sm:$0xff]
    %v1250 = vld [vmem:[%s22 + $0x528] sm:$0xff]
    %v1251 = vld [vmem:[%s22 + $0x530] sm:$0xff]
    %v1252 = vld [vmem:[%s22 + $0x538] sm:$0xff]
    %v1253 = vld [vmem:[%s22 + $0x540] sm:$0xff]
    %v1254 = vld [vmem:[%s22 + $0x548] sm:$0xff]
    %v1255 = vld [vmem:[%s22 + $0x550] sm:$0xff]
    %v1256 = vld [vmem:[%s22 + $0x558] sm:$0xff]
    %v1257 = vld [vmem:[%s22 + $0x560] sm:$0xff]
    %v1258 = vld [vmem:[%s22 + $0x568] sm:$0xff]
    %v1259 = vld [vmem:[%s22 + $0x570] sm:$0xff]
    %v1260 = vld [vmem:[%s22 + $0x578] sm:$0xff]
    %v1261 = vld [vmem:[%s22 + $0x580] sm:$0xff]
    %v1262 = vld [vmem:[%s22 + $0x588] sm:$0xff]
    %v1263 = vld [vmem:[%s22 + $0x590] sm:$0xff]
    %v1264 = vld [vmem:[%s22 + $0x598] sm:$0xff]
    %v1265 = vld [vmem:[%s22 + $0x5a0] sm:$0xff]
    %v1266 = vld [vmem:[%s22 + $0x5a8] sm:$0xff]
    %v1267 = vld [vmem:[%s22 + $0x5b0] sm:$0xff]
    %v1268 = vld [vmem:[%s22 + $0x5b8] sm:$0xff]
    %v1269 = vld [vmem:[%s22 + $0x5c0] sm:$0xff]
    %v1270 = vld [vmem:[%s22 + $0x5c8] sm:$0xff]
    %v1271 = vld [vmem:[%s22 + $0x5d0] sm:$0xff]
    %v1272 = vld [vmem:[%s22 + $0x5d8] sm:$0xff]
    %v1273 = vld [vmem:[%s22 + $0x5e0] sm:$0xff]
    %v1274 = vld [vmem:[%s22 + $0x5e8] sm:$0xff]
    %v1275 = vld [vmem:[%s22 + $0x5f0] sm:$0xff]
    %v1276 = vld [vmem:[%s22 + $0x5f8] sm:$0xff]
    %v1277 = vld [vmem:[%s22 + $0x600] sm:$0xff]
    %v1278 = vld [vmem:[%s22 + $0x608] sm:$0xff]
    %v1279 = vld [vmem:[%s22 + $0x610] sm:$0xff]
    %v1280 = vld [vmem:[%s22 + $0x618] sm:$0xff]
    %v1281 = vld [vmem:[%s22 + $0x620] sm:$0xff]
    %v1282 = vld [vmem:[%s22 + $0x628] sm:$0xff]
    %v1283 = vld [vmem:[%s22 + $0x630] sm:$0xff]
    %v1284 = vld [vmem:[%s22 + $0x638] sm:$0xff]
    %v1285 = vld [vmem:[%s22 + $0x640] sm:$0xff]
    %v1286 = vld [vmem:[%s22 + $0x648] sm:$0xff]
    %v1287 = vld [vmem:[%s22 + $0x650] sm:$0xff]
    %v1288 = vld [vmem:[%s22 + $0x658] sm:$0xff]
    %v1289 = vld [vmem:[%s22 + $0x660] sm:$0xff]
    %v1290 = vld [vmem:[%s22 + $0x668] sm:$0xff]
    %v1291 = vld [vmem:[%s22 + $0x670] sm:$0xff]
    %v1292 = vld [vmem:[%s22 + $0x678] sm:$0xff]
    %v1293 = vld [vmem:[%s22 + $0x680] sm:$0xff]
    %v1294 = vld [vmem:[%s22 + $0x688] sm:$0xff]
    %v1295 = vld [vmem:[%s22 + $0x690] sm:$0xff]
    %v1296 = vld [vmem:[%s22 + $0x698] sm:$0xff]
    %v1297 = vld [vmem:[%s22 + $0x6a0] sm:$0xff]
    %v1298 = vld [vmem:[%s22 + $0x6a8] sm:$0xff]
    %v1299 = vld [vmem:[%s22 + $0x6b0] sm:$0xff]
    %v1300 = vld [vmem:[%s22 + $0x6b8] sm:$0xff]
    %v1301 = vld [vmem:[%s22 + $0x6c0] sm:$0xff]
    %v1302 = vld [vmem:[%s22 + $0x6c8] sm:$0xff]
    %v1303 = vld [vmem:[%s22 + $0x6d0] sm:$0xff]
    %v1304 = vld [vmem:[%s22 + $0x6d8] sm:$0xff]
    %v1305 = vld [vmem:[%s22 + $0x6e0] sm:$0xff]
    %v1306 = vld [vmem:[%s22 + $0x6e8] sm:$0xff]
    %v1307 = vld [vmem:[%s22 + $0x6f0] sm:$0xff]
    %v1308 = vld [vmem:[%s22 + $0x6f8] sm:$0xff]
    %v1309 = vld [vmem:[%s22 + $0x700] sm:$0xff]
    %v1310 = vld [vmem:[%s22 + $0x708] sm:$0xff]
    %v1311 = vld [vmem:[%s22 + $0x710] sm:$0xff]
    %v1312 = vld [vmem:[%s22 + $0x718] sm:$0xff]
    %v1313 = vld [vmem:[%s22 + $0x720] sm:$0xff]
    %v1314 = vld [vmem:[%s22 + $0x728] sm:$0xff]
    %v1315 = vld [vmem:[%s22 + $0x730] sm:$0xff]
    %v1316 = vld [vmem:[%s22 + $0x738] sm:$0xff]
    %v1317 = vld [vmem:[%s22 + $0x740] sm:$0xff]
    %v1318 = vld [vmem:[%s22 + $0x748] sm:$0xff]
    %v1319 = vld [vmem:[%s22 + $0x750] sm:$0xff]
    %v1320 = vld [vmem:[%s22 + $0x758] sm:$0xff]
    %v1321 = vld [vmem:[%s22 + $0x760] sm:$0xff]
    %v1322 = vld [vmem:[%s22 + $0x768] sm:$0xff]
    %v1323 = vld [vmem:[%s22 + $0x770] sm:$0xff]
    %v1324 = vld [vmem:[%s22 + $0x778] sm:$0xff]
    %v1325 = vld [vmem:[%s22 + $0x780] sm:$0xff]
    %v1326 = vld [vmem:[%s22 + $0x788] sm:$0xff]
    %v1327 = vld [vmem:[%s22 + $0x790] sm:$0xff]
    %v1328 = vld [vmem:[%s22 + $0x798] sm:$0xff]
    %v1329 = vld [vmem:[%s22 + $0x7a0] sm:$0xff]
    %v1330 = vld [vmem:[%s22 + $0x7a8] sm:$0xff]
    %v1331 = vld [vmem:[%s22 + $0x7b0] sm:$0xff]
    %v1332 = vld [vmem:[%s22 + $0x7b8] sm:$0xff]
    %v1333 = vld [vmem:[%s22 + $0x7c0] sm:$0xff]
    %v1334 = vld [vmem:[%s22 + $0x7c8] sm:$0xff]
    %v1335 = vld [vmem:[%s22 + $0x7d0] sm:$0xff]
    %v1336 = vld [vmem:[%s22 + $0x7d8] sm:$0xff]
    %v1337 = vld [vmem:[%s22 + $0x7e0] sm:$0xff]
    %v1338 = vld [vmem:[%s22 + $0x7e8] sm:$0xff]
    %v1339 = vld [vmem:[%s22 + $0x7f0] sm:$0xff]
    %v1340 = vld [vmem:[%s22 + $0x7f8] sm:$0xff]
    %v1341 = vld [vmem:[%s23] sm:$0x1]
    %v1343 = vperm.slane %v1341, 0
    %1345 = vmatpush.msra.mxu0 %v1100
    %1346 = vmatpush.msra.mxu0 %v1099
    %1347 = vmatpush.msra.mxu0 %v1098
    %1348 = vmatpush.msra.mxu0 %v1097
    %1349 = vmatpush.msra.mxu0 %v1096
    %1350 = vmatpush.msra.mxu0 %v1095
    %1351 = vmatpush.msra.mxu0 %v1094
    %1352 = vmatpush.msra.mxu0 %v1093
    %1353 = vmatpush.msra.mxu0 %v1092
    %1354 = vmatpush.msra.mxu0 %v1091
    %1355 = vmatpush.msra.mxu0 %v1090
    %1356 = vmatpush.msra.mxu0 %v1089
    %1357 = vmatpush.msra.mxu0 %v1088
    %1358 = vmatpush.msra.mxu0 %v1087
    %1359 = vmatpush.msra.mxu0 %v1086
    %1360 = vmatpush.msra.mxu0 %v1085
    %1361 = vmatmul.f32.gmra.mxu0 %v1069
    %v1362 = vpop.f32.mrf.mxu0
    %v1363 = vadd.f32 %v1343, %v1362
    %1364 = vdwg.mxu0
    %1365 = vmatpush.msra.mxu0 %v1116
    %1366 = vmatpush.msra.mxu0 %v1115
    %1367 = vmatpush.msra.mxu0 %v1114
    %1368 = vmatpush.msra.mxu0 %v1113
    %1369 = vmatpush.msra.mxu0 %v1112
    %1370 = vmatpush.msra.mxu0 %v1111
    %1371 = vmatpush.msra.mxu0 %v1110
    %1372 = vmatpush.msra.mxu0 %v1109
    %1373 = vmatpush.msra.mxu0 %v1108
    %1374 = vmatpush.msra.mxu0 %v1107
    %1375 = vmatpush.msra.mxu0 %v1106
    %1376 = vmatpush.msra.mxu0 %v1105
    %1377 = vmatpush.msra.mxu0 %v1104
    %1378 = vmatpush.msra.mxu0 %v1103
    %1379 = vmatpush.msra.mxu0 %v1102
    %1380 = vmatpush.msra.mxu0 %v1101
    %1381 = vmatmul.f32.gmra.mxu0 %v1070
    %v1382 = vpop.f32.mrf.mxu0
    %v1383 = vadd.f32 %v1363, %v1382
    %1384 = vdwg.mxu0
    %1385 = vmatpush.msra.mxu0 %v1132
    %1386 = vmatpush.msra.mxu0 %v1131
    %1387 = vmatpush.msra.mxu0 %v1130
    %1388 = vmatpush.msra.mxu0 %v1129
    %1389 = vmatpush.msra.mxu0 %v1128
    %1390 = vmatpush.msra.mxu0 %v1127
    %1391 = vmatpush.msra.mxu0 %v1126
    %1392 = vmatpush.msra.mxu0 %v1125
    %1393 = vmatpush.msra.mxu0 %v1124
    %1394 = vmatpush.msra.mxu0 %v1123
    %1395 = vmatpush.msra.mxu0 %v1122
    %1396 = vmatpush.msra.mxu0 %v1121
    %1397 = vmatpush.msra.mxu0 %v1120
    %1398 = vmatpush.msra.mxu0 %v1119
    %1399 = vmatpush.msra.mxu0 %v1118
    %1400 = vmatpush.msra.mxu0 %v1117
    %1401 = vmatmul.f32.gmra.mxu0 %v1071
    %v1402 = vpop.f32.mrf.mxu0
    %v1403 = vadd.f32 %v1383, %v1402
    %1404 = vdwg.mxu0
    %1405 = vmatpush.msra.mxu0 %v1148
    %1406 = vmatpush.msra.mxu0 %v1147
    %1407 = vmatpush.msra.mxu0 %v1146
    %1408 = vmatpush.msra.mxu0 %v1145
    %1409 = vmatpush.msra.mxu0 %v1144
    %1410 = vmatpush.msra.mxu0 %v1143
    %1411 = vmatpush.msra.mxu0 %v1142
    %1412 = vmatpush.msra.mxu0 %v1141
    %1413 = vmatpush.msra.mxu0 %v1140
    %1414 = vmatpush.msra.mxu0 %v1139
    %1415 = vmatpush.msra.mxu0 %v1138
    %1416 = vmatpush.msra.mxu0 %v1137
    %1417 = vmatpush.msra.mxu0 %v1136
    %1418 = vmatpush.msra.mxu0 %v1135
    %1419 = vmatpush.msra.mxu0 %v1134
    %1420 = vmatpush.msra.mxu0 %v1133
    %1421 = vmatmul.f32.gmra.mxu0 %v1072
    %v1422 = vpop.f32.mrf.mxu0
    %v1423 = vadd.f32 %v1403, %v1422
    %1424 = vdwg.mxu0
    %1425 = vmatpush.msra.mxu0 %v1164
    %1426 = vmatpush.msra.mxu0 %v1163
    %1427 = vmatpush.msra.mxu0 %v1162
    %1428 = vmatpush.msra.mxu0 %v1161
    %1429 = vmatpush.msra.mxu0 %v1160
    %1430 = vmatpush.msra.mxu0 %v1159
    %1431 = vmatpush.msra.mxu0 %v1158
    %1432 = vmatpush.msra.mxu0 %v1157
    %1433 = vmatpush.msra.mxu0 %v1156
    %1434 = vmatpush.msra.mxu0 %v1155
    %1435 = vmatpush.msra.mxu0 %v1154
    %1436 = vmatpush.msra.mxu0 %v1153
    %1437 = vmatpush.msra.mxu0 %v1152
    %1438 = vmatpush.msra.mxu0 %v1151
    %1439 = vmatpush.msra.mxu0 %v1150
    %1440 = vmatpush.msra.mxu0 %v1149
    %1441 = vmatmul.f32.gmra.mxu0 %v1073
    %v1442 = vpop.f32.mrf.mxu0
    %v1443 = vadd.f32 %v1423, %v1442
    %1444 = vdwg.mxu0
    %1445 = vmatpush.msra.mxu0 %v1180
    %1446 = vmatpush.msra.mxu0 %v1179
    %1447 = vmatpush.msra.mxu0 %v1178
    %1448 = vmatpush.msra.mxu0 %v1177
    %1449 = vmatpush.msra.mxu0 %v1176
    %1450 = vmatpush.msra.mxu0 %v1175
    %1451 = vmatpush.msra.mxu0 %v1174
    %1452 = vmatpush.msra.mxu0 %v1173
    %1453 = vmatpush.msra.mxu0 %v1172
    %1454 = vmatpush.msra.mxu0 %v1171
    %1455 = vmatpush.msra.mxu0 %v1170
    %1456 = vmatpush.msra.mxu0 %v1169
    %1457 = vmatpush.msra.mxu0 %v1168
    %1458 = vmatpush.msra.mxu0 %v1167
    %1459 = vmatpush.msra.mxu0 %v1166
    %1460 = vmatpush.msra.mxu0 %v1165
    %1461 = vmatmul.f32.gmra.mxu0 %v1074
    %v1462 = vpop.f32.mrf.mxu0
    %v1463 = vadd.f32 %v1443, %v1462
    %1464 = vdwg.mxu0
    %1465 = vmatpush.msra.mxu0 %v1196
    %1466 = vmatpush.msra.mxu0 %v1195
    %1467 = vmatpush.msra.mxu0 %v1194
    %1468 = vmatpush.msra.mxu0 %v1193
    %1469 = vmatpush.msra.mxu0 %v1192
    %1470 = vmatpush.msra.mxu0 %v1191
    %1471 = vmatpush.msra.mxu0 %v1190
    %1472 = vmatpush.msra.mxu0 %v1189
    %1473 = vmatpush.msra.mxu0 %v1188
    %1474 = vmatpush.msra.mxu0 %v1187
    %1475 = vmatpush.msra.mxu0 %v1186
    %1476 = vmatpush.msra.mxu0 %v1185
    %1477 = vmatpush.msra.mxu0 %v1184
    %1478 = vmatpush.msra.mxu0 %v1183
    %1479 = vmatpush.msra.mxu0 %v1182
    %1480 = vmatpush.msra.mxu0 %v1181
    %1481 = vmatmul.f32.gmra.mxu0 %v1075
    %v1482 = vpop.f32.mrf.mxu0
    %v1483 = vadd.f32 %v1463, %v1482
    %1484 = vdwg.mxu0
    %1485 = vmatpush.msra.mxu0 %v1212
    %1486 = vmatpush.msra.mxu0 %v1211
    %1487 = vmatpush.msra.mxu0 %v1210
    %1488 = vmatpush.msra.mxu0 %v1209
    %1489 = vmatpush.msra.mxu0 %v1208
    %1490 = vmatpush.msra.mxu0 %v1207
    %1491 = vmatpush.msra.mxu0 %v1206
    %1492 = vmatpush.msra.mxu0 %v1205
    %1493 = vmatpush.msra.mxu0 %v1204
    %1494 = vmatpush.msra.mxu0 %v1203
    %1495 = vmatpush.msra.mxu0 %v1202
    %1496 = vmatpush.msra.mxu0 %v1201
    %1497 = vmatpush.msra.mxu0 %v1200
    %1498 = vmatpush.msra.mxu0 %v1199
    %1499 = vmatpush.msra.mxu0 %v1198
    %1500 = vmatpush.msra.mxu0 %v1197
    %1501 = vmatmul.f32.gmra.mxu0 %v1076
    %v1502 = vpop.f32.mrf.mxu0
    %v1503 = vadd.f32 %v1483, %v1502
    %1504 = vdwg.mxu0
    %1505 = vmatpush.msra.mxu0 %v1228
    %1506 = vmatpush.msra.mxu0 %v1227
    %1507 = vmatpush.msra.mxu0 %v1226
    %1508 = vmatpush.msra.mxu0 %v1225
    %1509 = vmatpush.msra.mxu0 %v1224
    %1510 = vmatpush.msra.mxu0 %v1223
    %1511 = vmatpush.msra.mxu0 %v1222
    %1512 = vmatpush.msra.mxu0 %v1221
    %1513 = vmatpush.msra.mxu0 %v1220
    %1514 = vmatpush.msra.mxu0 %v1219
    %1515 = vmatpush.msra.mxu0 %v1218
    %1516 = vmatpush.msra.mxu0 %v1217
    %1517 = vmatpush.msra.mxu0 %v1216
    %1518 = vmatpush.msra.mxu0 %v1215
    %1519 = vmatpush.msra.mxu0 %v1214
    %1520 = vmatpush.msra.mxu0 %v1213
    %1521 = vmatmul.f32.gmra.mxu0 %v1077
    %v1522 = vpop.f32.mrf.mxu0
    %v1523 = vadd.f32 %v1503, %v1522
    %1524 = vdwg.mxu0
    %1525 = vmatpush.msra.mxu0 %v1244
    %1526 = vmatpush.msra.mxu0 %v1243
    %1527 = vmatpush.msra.mxu0 %v1242
    %1528 = vmatpush.msra.mxu0 %v1241
    %1529 = vmatpush.msra.mxu0 %v1240
    %1530 = vmatpush.msra.mxu0 %v1239
    %1531 = vmatpush.msra.mxu0 %v1238
    %1532 = vmatpush.msra.mxu0 %v1237
    %1533 = vmatpush.msra.mxu0 %v1236
    %1534 = vmatpush.msra.mxu0 %v1235
    %1535 = vmatpush.msra.mxu0 %v1234
    %1536 = vmatpush.msra.mxu0 %v1233
    %1537 = vmatpush.msra.mxu0 %v1232
    %1538 = vmatpush.msra.mxu0 %v1231
    %1539 = vmatpush.msra.mxu0 %v1230
    %1540 = vmatpush.msra.mxu0 %v1229
    %1541 = vmatmul.f32.gmra.mxu0 %v1078
    %v1542 = vpop.f32.mrf.mxu0
    %v1543 = vadd.f32 %v1523, %v1542
    %1544 = vdwg.mxu0
    %1545 = vmatpush.msra.mxu0 %v1260
    %1546 = vmatpush.msra.mxu0 %v1259
    %1547 = vmatpush.msra.mxu0 %v1258
    %1548 = vmatpush.msra.mxu0 %v1257
    %1549 = vmatpush.msra.mxu0 %v1256
    %1550 = vmatpush.msra.mxu0 %v1255
    %1551 = vmatpush.msra.mxu0 %v1254
    %1552 = vmatpush.msra.mxu0 %v1253
    %1553 = vmatpush.msra.mxu0 %v1252
    %1554 = vmatpush.msra.mxu0 %v1251
    %1555 = vmatpush.msra.mxu0 %v1250
    %1556 = vmatpush.msra.mxu0 %v1249
    %1557 = vmatpush.msra.mxu0 %v1248
    %1558 = vmatpush.msra.mxu0 %v1247
    %1559 = vmatpush.msra.mxu0 %v1246
    %1560 = vmatpush.msra.mxu0 %v1245
    %1561 = vmatmul.f32.gmra.mxu0 %v1079
    %v1562 = vpop.f32.mrf.mxu0
    %v1563 = vadd.f32 %v1543, %v1562
    %1564 = vdwg.mxu0
    %1565 = vmatpush.msra.mxu0 %v1276
    %1566 = vmatpush.msra.mxu0 %v1275
    %1567 = vmatpush.msra.mxu0 %v1274
    %1568 = vmatpush.msra.mxu0 %v1273
    %1569 = vmatpush.msra.mxu0 %v1272
    %1570 = vmatpush.msra.mxu0 %v1271
    %1571 = vmatpush.msra.mxu0 %v1270
    %1572 = vmatpush.msra.mxu0 %v1269
    %1573 = vmatpush.msra.mxu0 %v1268
    %1574 = vmatpush.msra.mxu0 %v1267
    %1575 = vmatpush.msra.mxu0 %v1266
    %1576 = vmatpush.msra.mxu0 %v1265
    %1577 = vmatpush.msra.mxu0 %v1264
    %1578 = vmatpush.msra.mxu0 %v1263
    %1579 = vmatpush.msra.mxu0 %v1262
    %1580 = vmatpush.msra.mxu0 %v1261
    %1581 = vmatmul.f32.gmra.mxu0 %v1080
    %v1582 = vpop.f32.mrf.mxu0
    %v1583 = vadd.f32 %v1563, %v1582
    %1584 = vdwg.mxu0
    %1585 = vmatpush.msra.mxu0 %v1292
    %1586 = vmatpush.msra.mxu0 %v1291
    %1587 = vmatpush.msra.mxu0 %v1290
    %1588 = vmatpush.msra.mxu0 %v1289
    %1589 = vmatpush.msra.mxu0 %v1288
    %1590 = vmatpush.msra.mxu0 %v1287
    %1591 = vmatpush.msra.mxu0 %v1286
    %1592 = vmatpush.msra.mxu0 %v1285
    %1593 = vmatpush.msra.mxu0 %v1284
    %1594 = vmatpush.msra.mxu0 %v1283
    %1595 = vmatpush.msra.mxu0 %v1282
    %1596 = vmatpush.msra.mxu0 %v1281
    %1597 = vmatpush.msra.mxu0 %v1280
    %1598 = vmatpush.msra.mxu0 %v1279
    %1599 = vmatpush.msra.mxu0 %v1278
    %1600 = vmatpush.msra.mxu0 %v1277
    %1601 = vmatmul.f32.gmra.mxu0 %v1081
    %v1602 = vpop.f32.mrf.mxu0
    %v1603 = vadd.f32 %v1583, %v1602
    %1604 = vdwg.mxu0
    %1605 = vmatpush.msra.mxu0 %v1308
    %1606 = vmatpush.msra.mxu0 %v1307
    %1607 = vmatpush.msra.mxu0 %v1306
    %1608 = vmatpush.msra.mxu0 %v1305
    %1609 = vmatpush.msra.mxu0 %v1304
    %1610 = vmatpush.msra.mxu0 %v1303
    %1611 = vmatpush.msra.mxu0 %v1302
    %1612 = vmatpush.msra.mxu0 %v1301
    %1613 = vmatpush.msra.mxu0 %v1300
    %1614 = vmatpush.msra.mxu0 %v1299
    %1615 = vmatpush.msra.mxu0 %v1298
    %1616 = vmatpush.msra.mxu0 %v1297
    %1617 = vmatpush.msra.mxu0 %v1296
    %1618 = vmatpush.msra.mxu0 %v1295
    %1619 = vmatpush.msra.mxu0 %v1294
    %1620 = vmatpush.msra.mxu0 %v1293
    %1621 = vmatmul.f32.gmra.mxu0 %v1082
    %v1622 = vpop.f32.mrf.mxu0
    %v1623 = vadd.f32 %v1603, %v1622
    %1624 = vdwg.mxu0
    %1625 = vmatpush.msra.mxu0 %v1324
    %1626 = vmatpush.msra.mxu0 %v1323
    %1627 = vmatpush.msra.mxu0 %v1322
    %1628 = vmatpush.msra.mxu0 %v1321
    %1629 = vmatpush.msra.mxu0 %v1320
    %1630 = vmatpush.msra.mxu0 %v1319
    %1631 = vmatpush.msra.mxu0 %v1318
    %1632 = vmatpush.msra.mxu0 %v1317
    %1633 = vmatpush.msra.mxu0 %v1316
    %1634 = vmatpush.msra.mxu0 %v1315
    %1635 = vmatpush.msra.mxu0 %v1314
    %1636 = vmatpush.msra.mxu0 %v1313
    %1637 = vmatpush.msra.mxu0 %v1312
    %1638 = vmatpush.msra.mxu0 %v1311
    %1639 = vmatpush.msra.mxu0 %v1310
    %1640 = vmatpush.msra.mxu0 %v1309
    %1641 = vmatmul.f32.gmra.mxu0 %v1083
    %v1642 = vpop.f32.mrf.mxu0
    %v1643 = vadd.f32 %v1623, %v1642
    %1644 = vdwg.mxu0
    %1645 = vmatpush.msra.mxu0 %v1340
    %1646 = vmatpush.msra.mxu0 %v1339
    %1647 = vmatpush.msra.mxu0 %v1338
    %1648 = vmatpush.msra.mxu0 %v1337
    %1649 = vmatpush.msra.mxu0 %v1336
    %1650 = vmatpush.msra.mxu0 %v1335
    %1651 = vmatpush.msra.mxu0 %v1334
    %1652 = vmatpush.msra.mxu0 %v1333
    %1653 = vmatpush.msra.mxu0 %v1332
    %1654 = vmatpush.msra.mxu0 %v1331
    %1655 = vmatpush.msra.mxu0 %v1330
    %1656 = vmatpush.msra.mxu0 %v1329
    %1657 = vmatpush.msra.mxu0 %v1328
    %1658 = vmatpush.msra.mxu0 %v1327
    %1659 = vmatpush.msra.mxu0 %v1326
    %1660 = vmatpush.msra.mxu0 %v1325
    %1661 = vmatmul.f32.gmra.mxu0 %v1084
    %v1662 = vpop.f32.mrf.mxu0
    %v1663 = vadd.f32 %v1643, %v1662
    %1664 = vdwg.mxu0
    %v1665 = vadd.f32 %v645, %v1663
    %v1666 = vsel %vm222, %v1665, 0.0
    %1667 = vadd.xlane.f32.xlu0 %v1666
    %v1668 = vpop.xlane.xlu0 %1667
    %v1669 = vmul.f32 %v1668, %v616
    %v1670 = vsub.f32 %v1665, %v1669
    %v1671 = vmul.f32 %v1670, %v1670
    %v1672 = vsel %vm222, %v1671, 0.0
    %1673 = vadd.xlane.f32.xlu0 %v1672
    %v1674 = vpop.xlane.xlu0 %1673
    %v1675 = vmul.f32 %v1674, %v616
    %v1676 = vadd.f32 %v1675, 1e-05
    %v1677 = vrsqrt.pop %v1676
    %v1678 = vmul.f32 %v1677, %v1676
    %v1679 = vmul.f32 %v1678, %v1677
    %v1680 = vmul.f32 0.5, %v1679
    %v1681 = vsub.f32 1.5, %v1680
    %v1682 = vmul.f32 %v1677, %v1681
    %vm1683 = vweird.f32 %v1676
    %vm1684 = vweird.f32 %v1677
    %vm1685 = vmor %vm1683, %vm1684
    %v1686 = vsel %vm1685, %v1677, %v1682
    %v1687 = vmul.f32 %v1670, %v1686
    %v1688 = vld [vmem:[%s24] sm:$0x1]
    %v1690 = vperm.slane %v1688, 0
    %v1692 = vmul.f32 %v1687, %v1690
    %v1693 = vld [vmem:[%s25] sm:$0x1]
    %v1695 = vperm.slane %v1693, 0
    %v1697 = vadd.f32 %v1692, %v1695
    %1698 = vst.msk [vmem:[#allocation2] sm:$0xff] %vm222, %v1697
    // Predicated region
    $region106: #{tpu_custom_call.1} parent=1 // pred_check
      _
    $region107: #{tpu_custom_call.1} parent=1 // pred_check_branch
      %1700 = sbr.rel (0) target = $region109
    $region108: #{tpu_custom_call.1} parent=1 // pred_region
      %1702 = vsyncadd [#allocation3], 0
      %s1704 = sshll.u32 [#allocation2], 4
      %s1705 = int_to_ptr.vmem [resolvable:$true] %s1704
      %s1706 = sshll.u32 %s26, 4
      %s1707 = int_to_ptr.hbm [resolvable:$true] %s1706
      %1709 = dma.vmem_to_hbm [thread:$0]  %s1705, 128, %s1707, [#allocation3]
    $region109: #{tpu_custom_call.1} parent=1 // pred_fallthru
      _
    // Predicated region
    $region110: #{tpu_custom_call.1} parent=1 // pred_check
      _
    $region111: #{tpu_custom_call.1} parent=1 // pred_check_branch
      %1711 = sbr.rel (0) target = $region113
    $region112: #{tpu_custom_call.1} parent=1 // pred_region
      %1713 = dma.done [#allocation3], 128
    $region113: #{tpu_custom_call.1} parent=1 // pred_fallthru
      _
    %1714 = vsyncpa [#allocation3], 1

</llo_original>
